<compile_context>
chip_gen: v6e
topology: v6e:2x2x1
jax: 0.10.0
libtpu: 0.0.40
codegen_flags: <defaults>
</compile_context>

<pallas_src>
import functools

import jax
import jax.numpy as jnp
from jax.experimental import pallas as pl
from jax.experimental.pallas import tpu as pltpu

N = 3                   # n-gram order
NCTX = N - 1            # context length = 2
EMBED_DIM = 10
HIDDEN = 128
VOCAB_SIZE = 128        # small synthetic vocabulary (multiple of 128 lanes)
TILE_B = 256            # batch tile: fills MXU M on v5e (128) and v6e/v7x (256)


def _ngram_kernel(idx_ref, proj_ref, b1_ref, w2_ref, b2_ref, out_ref):
    # idx_ref : (TB, NCTX) int32        token ids for this tile of contexts
    # proj_ref: (NCTX, VOCAB, HIDDEN)   folded embedding @ W1-slice tables
    # b1_ref  : (1, HIDDEN)             layer-1 bias
    # w2_ref  : (HIDDEN, VOCAB)         layer-2 weight
    # b2_ref  : (1, VOCAB)              layer-2 bias
    # out_ref : (TB, VOCAB)             log-probs
    tb = out_ref.shape[0]
    idx = idx_ref[...]                                               # (TB, NCTX)
    lane = jax.lax.broadcasted_iota(jnp.int32, (tb, VOCAB_SIZE), 1)  # lane ids

    # Layer 1: h = sum_p one_hot(idx_p) @ proj[p]  (== emb[idx_p] @ W1[p-block])
    h = jnp.zeros((tb, HIDDEN), jnp.float32)
    for p in range(NCTX):  # static unroll (NCTX = 2)
        onehot = (lane == idx[:, p:p + 1]).astype(jnp.float32)       # (TB, VOCAB)
        h = h + jnp.dot(onehot, proj_ref[p],
                        preferred_element_type=jnp.float32)
    h = jnp.maximum(h + b1_ref[...], 0.0)                            # relu

    # Layer 2
    logits = jnp.dot(h, w2_ref[...],
                     preferred_element_type=jnp.float32) + b2_ref[...]

    # log_softmax over the vocab axis (numerically stable)
    m = jnp.max(logits, axis=-1, keepdims=True)
    shifted = logits - m
    lse = jnp.log(jnp.sum(jnp.exp(shifted), axis=-1, keepdims=True))
    out_ref[...] = shifted - lse


@functools.partial(jax.jit, static_argnames=("tile_b",))
def ngram_forward_batch(x_idx, emb_table, w1, b1, w2, b2, *, tile_b=TILE_B):
    """x_idx: (B, N-1) int32 contexts -> (B, VOCAB_SIZE) f32 log-probs."""
    B = x_idx.shape[0]

    # One-time weight folding (exact up to float reassociation):
    #   embeds @ W1 = sum_p emb[idx_p] @ W1[p*E:(p+1)*E]
    #   proj[p]     = emb_table @ W1[p*E:(p+1)*E]            (VOCAB, HIDDEN)
    proj = jnp.einsum("ve,peh->pvh", emb_table,
                      w1.reshape(NCTX, EMBED_DIM, HIDDEN)).astype(jnp.float32)

    num_tiles = pl.cdiv(B, tile_b)
    b_pad = num_tiles * tile_b
    if b_pad != B:
        x_idx = jnp.pad(x_idx, ((0, b_pad - B), (0, 0)))  # pad with id 0 (valid)

    const = lambda i: (0, 0)
    out = pl.pallas_call(
        _ngram_kernel,
        out_shape=jax.ShapeDtypeStruct((b_pad, VOCAB_SIZE), jnp.float32),
        grid=(num_tiles,),
        in_specs=[
            pl.BlockSpec((tile_b, NCTX), lambda i: (i, 0)),              # advances
            pl.BlockSpec((NCTX, VOCAB_SIZE, HIDDEN), lambda i: (0, 0, 0)),  # resident
            pl.BlockSpec((1, HIDDEN), const),                            # resident
            pl.BlockSpec((HIDDEN, VOCAB_SIZE), const),                   # resident
            pl.BlockSpec((1, VOCAB_SIZE), const),                        # resident
        ],
        out_specs=pl.BlockSpec((tile_b, VOCAB_SIZE), lambda i: (i, 0)),
        compiler_params=pltpu.CompilerParams(
            dimension_semantics=("parallel",)),  # 2x on v7x (2 TCs); no-op on v5e/v6e
    )(x_idx, proj, b1, w2, b2)
    return out[:B]


def ngram_forward(x_idx, emb_table, w1, b1, w2, b2):
    """Original module signature: x_idx (N-1,) ints -> (1, VOCAB_SIZE) log-probs."""
    return ngram_forward_batch(x_idx[None, :], emb_table, w1, b1, w2, b2, tile_b=8)


def ngram_reference(x_idx, emb_table, w1, b1, w2, b2):
    """Pure-JAX reference matching the PyTorch forward, batched over rows."""
    embeds = jnp.take(emb_table, x_idx, axis=0).reshape(x_idx.shape[0], -1)
    h = jnp.maximum(embeds @ w1 + b1, 0.0)
    logits = h @ w2 + b2
    return jax.nn.log_softmax(logits, axis=-1)


def init_params(key):
    k_emb, k_w1, k_b1, k_w2, k_b2 = jax.random.split(key, 5)
    ctx_dim = EMBED_DIM * NCTX
    emb_table = jax.random.normal(k_emb, (VOCAB_SIZE, EMBED_DIM), jnp.float32)
    # PyTorch Linear default init: U(-1/sqrt(fan_in), 1/sqrt(fan_in))
    lim1 = 1.0 / jnp.sqrt(jnp.float32(ctx_dim))
    w1 = jax.random.uniform(k_w1, (ctx_dim, HIDDEN), jnp.float32, -lim1, lim1)
    b1 = jax.random.uniform(k_b1, (1, HIDDEN), jnp.float32, -lim1, lim1)
    lim2 = 1.0 / jnp.sqrt(jnp.float32(HIDDEN))
    w2 = jax.random.uniform(k_w2, (HIDDEN, VOCAB_SIZE), jnp.float32, -lim2, lim2)
    b2 = jax.random.uniform(k_b2, (1, VOCAB_SIZE), jnp.float32, -lim2, lim2)
    return emb_table, w1, b1, w2, b2


if __name__ == "__main__":
    key = jax.random.PRNGKey(0)
    k_params, k_x = jax.random.split(key)
    emb_table, w1, b1, w2, b2 = init_params(k_params)

    # Batch of B contexts, each of N-1 = 2 token indices.
    B = 512
    x_idx = jax.random.randint(k_x, (B, NCTX), 0, VOCAB_SIZE, dtype=jnp.int32)

    log_probs = ngram_forward_batch(x_idx, emb_table, w1, b1, w2, b2)
    log_probs = jax.block_until_ready(log_probs)
    assert log_probs.shape == (B, VOCAB_SIZE)

    # Rows must be valid log-prob distributions.
    assert jnp.allclose(jnp.sum(jnp.exp(log_probs), axis=1), 1.0, atol=1e-4)

    # Must match the plain-JAX (PyTorch-equivalent) reference.
    ref = ngram_reference(x_idx, emb_table, w1, b1, w2, b2)
    assert jnp.allclose(log_probs, ref, atol=1e-4, rtol=1e-4)

    # Single-context path with the original forward() signature.
    one = jax.block_until_ready(
        ngram_forward(x_idx[0], emb_table, w1, b1, w2, b2))
    assert one.shape == (1, VOCAB_SIZE)
    assert jnp.allclose(one, ref[:1], atol=1e-4, rtol=1e-4)

    print("KERNEL_OK")
</pallas_src>

<mosaic_0001>
module attributes {stable_mosaic.version = 11 : i64} {
  func.func @_ngram_kernel(%arg0: i32, %arg1: memref<256x2xi32, #tpu.memory_space<vmem>>, %arg2: memref<2x128x128xf32, #tpu.memory_space<vmem>>, %arg3: memref<1x128xf32, #tpu.memory_space<vmem>>, %arg4: memref<128x128xf32, #tpu.memory_space<vmem>>, %arg5: memref<1x128xf32, #tpu.memory_space<vmem>>, %arg6: memref<256x128xf32, #tpu.memory_space<vmem>>) attributes {dimension_semantics = [#tpu.dimension_semantics<parallel>], iteration_bounds = array<i64: 2>, scalar_prefetch = 0 : i64, scratch_operands = 0 : i64, tpu.core_type = #tpu.core_type<tc>, window_params = [{transform_indices = @transform_0, window_bounds = array<i64: 256, 2>}, {pipeline_mode = #tpu.pipeline_mode<synchronous>, transform_indices = @transform_1, window_bounds = array<i64: 2, 128, 128>}, {pipeline_mode = #tpu.pipeline_mode<synchronous>, transform_indices = @transform_2, window_bounds = array<i64: 1, 128>}, {pipeline_mode = #tpu.pipeline_mode<synchronous>, transform_indices = @transform_3, window_bounds = array<i64: 128, 128>}, {pipeline_mode = #tpu.pipeline_mode<synchronous>, transform_indices = @transform_4, window_bounds = array<i64: 1, 128>}, {transform_indices = @transform_5, window_bounds = array<i64: 256, 128>}]} {
    %c0 = arith.constant 0 : index
    %c0_0 = arith.constant 0 : index
    %0 = vector.load %arg1[%c0, %c0_0] : memref<256x2xi32, #tpu.memory_space<vmem>>, vector<256x2xi32>
    %1 = tpu.iota {dimensions = array<i32: 1>} : vector<256x128xi32>
    %cst = arith.constant 0.000000e+00 : f32
    %2 = vector.broadcast %cst : f32 to vector<256x128xf32>
    %3 = vector.extract_strided_slice %0 {offsets = [0, 0], sizes = [256, 1], strides = [1, 1]} : vector<256x2xi32> to vector<256x1xi32>
    %4 = vector.broadcast %3 : vector<256x1xi32> to vector<256x128xi32>
    %5 = arith.cmpi eq, %1, %4 : vector<256x128xi32>
    %6 = arith.extui %5 : vector<256x128xi1> to vector<256x128xi32>
    %7 = arith.sitofp %6 : vector<256x128xi32> to vector<256x128xf32>
    %c0_1 = arith.constant 0 : index
    %c0_2 = arith.constant 0 : index
    %c0_3 = arith.constant 0 : index
    %8 = vector.load %arg2[%c0_1, %c0_2, %c0_3] : memref<2x128x128xf32, #tpu.memory_space<vmem>>, vector<1x128x128xf32>
    %9 = vector.shape_cast %8 : vector<1x128x128xf32> to vector<128x128xf32>
    %cst_4 = arith.constant dense<0.000000e+00> : vector<256x128xf32>
    %10 = tpu.matmul %7, %9, %cst_4 {dimension_numbers = #tpu.dot_dimension_numbers<[1], [0], [0], [1], [0, 0, 1, 1], [], []>} : vector<256x128xf32>, vector<128x128xf32>, vector<256x128xf32> -> vector<256x128xf32>
    %11 = arith.addf %2, %10 : vector<256x128xf32>
    %12 = vector.extract_strided_slice %0 {offsets = [0, 1], sizes = [256, 1], strides = [1, 1]} : vector<256x2xi32> to vector<256x1xi32>
    %13 = vector.broadcast %12 : vector<256x1xi32> to vector<256x128xi32>
    %14 = arith.cmpi eq, %1, %13 : vector<256x128xi32>
    %15 = arith.extui %14 : vector<256x128xi1> to vector<256x128xi32>
    %16 = arith.sitofp %15 : vector<256x128xi32> to vector<256x128xf32>
    %c1 = arith.constant 1 : index
    %c0_5 = arith.constant 0 : index
    %c0_6 = arith.constant 0 : index
    %17 = vector.load %arg2[%c1, %c0_5, %c0_6] : memref<2x128x128xf32, #tpu.memory_space<vmem>>, vector<1x128x128xf32>
    %18 = vector.shape_cast %17 : vector<1x128x128xf32> to vector<128x128xf32>
    %cst_7 = arith.constant dense<0.000000e+00> : vector<256x128xf32>
    %19 = tpu.matmul %16, %18, %cst_7 {dimension_numbers = #tpu.dot_dimension_numbers<[1], [0], [0], [1], [0, 0, 1, 1], [], []>} : vector<256x128xf32>, vector<128x128xf32>, vector<256x128xf32> -> vector<256x128xf32>
    %20 = arith.addf %11, %19 : vector<256x128xf32>
    %c0_8 = arith.constant 0 : index
    %c0_9 = arith.constant 0 : index
    %21 = vector.load %arg3[%c0_8, %c0_9] : memref<1x128xf32, #tpu.memory_space<vmem>>, vector<1x128xf32>
    %22 = vector.broadcast %21 : vector<1x128xf32> to vector<256x128xf32>
    %23 = arith.addf %20, %22 : vector<256x128xf32>
    %cst_10 = arith.constant 0.000000e+00 : f32
    %24 = vector.broadcast %cst_10 : f32 to vector<256x128xf32>
    %25 = arith.maximumf %23, %24 : vector<256x128xf32>
    %c0_11 = arith.constant 0 : index
    %c0_12 = arith.constant 0 : index
    %26 = vector.load %arg4[%c0_11, %c0_12] : memref<128x128xf32, #tpu.memory_space<vmem>>, vector<128x128xf32>
    %cst_13 = arith.constant dense<0.000000e+00> : vector<256x128xf32>
    %27 = tpu.matmul %25, %26, %cst_13 {dimension_numbers = #tpu.dot_dimension_numbers<[1], [0], [0], [1], [0, 0, 1, 1], [], []>} : vector<256x128xf32>, vector<128x128xf32>, vector<256x128xf32> -> vector<256x128xf32>
    %c0_14 = arith.constant 0 : index
    %c0_15 = arith.constant 0 : index
    %28 = vector.load %arg5[%c0_14, %c0_15] : memref<1x128xf32, #tpu.memory_space<vmem>>, vector<1x128xf32>
    %29 = vector.broadcast %28 : vector<1x128xf32> to vector<256x128xf32>
    %30 = arith.addf %27, %29 : vector<256x128xf32>
    %cst_16 = arith.constant dense<0xFF800000> : vector<256xf32>
    %31 = vector.multi_reduction <maximumf>, %30, %cst_16 [1] : vector<256x128xf32> to vector<256xf32>
    %32 = vector.shape_cast %31 : vector<256xf32> to vector<256x1xf32>
    %33 = vector.broadcast %32 : vector<256x1xf32> to vector<256x128xf32>
    %34 = arith.subf %30, %33 : vector<256x128xf32>
    %35 = math.exp %34 : vector<256x128xf32>
    %cst_17 = arith.constant dense<0.000000e+00> : vector<256xf32>
    %36 = vector.multi_reduction <add>, %35, %cst_17 [1] : vector<256x128xf32> to vector<256xf32>
    %37 = vector.shape_cast %36 : vector<256xf32> to vector<256x1xf32>
    %38 = math.log %37 : vector<256x1xf32>
    %39 = vector.broadcast %38 : vector<256x1xf32> to vector<256x128xf32>
    %40 = arith.subf %34, %39 : vector<256x128xf32>
    %c0_18 = arith.constant 0 : index
    %c0_19 = arith.constant 0 : index
    %41 = vector.load %arg6[%c0_18, %c0_19] : memref<256x128xf32, #tpu.memory_space<vmem>>, vector<256x128xf32>
    tpu.vector_store %arg6[%c0_18, %c0_19], %40 {strides = array<i32>} : memref<256x128xf32, #tpu.memory_space<vmem>>, vector<256x128xf32>,
    return
  }
  func.func @transform_0(%arg0: i32) -> (i32, i32) {
    %c0_i32 = arith.constant 0 : i32
    %c0_i32_0 = arith.constant 0 : i32
    return %arg0, %c0_i32 : i32, i32
  }
  func.func @transform_1(%arg0: i32) -> (i32, i32, i32) {
    %c0_i32 = arith.constant 0 : i32
    %c0_i32_0 = arith.constant 0 : i32
    %c0_i32_1 = arith.constant 0 : i32
    %c0_i32_2 = arith.constant 0 : i32
    return %c0_i32, %c0_i32_0, %c0_i32_1 : i32, i32, i32
  }
  func.func @transform_2(%arg0: i32) -> (i32, i32) {
    %c0_i32 = arith.constant 0 : i32
    %c0_i32_0 = arith.constant 0 : i32
    %c0_i32_1 = arith.constant 0 : i32
    return %c0_i32, %c0_i32_0 : i32, i32
  }
  func.func @transform_3(%arg0: i32) -> (i32, i32) {
    %c0_i32 = arith.constant 0 : i32
    %c0_i32_0 = arith.constant 0 : i32
    %c0_i32_1 = arith.constant 0 : i32
    return %c0_i32, %c0_i32_0 : i32, i32
  }
  func.func @transform_4(%arg0: i32) -> (i32, i32) {
    %c0_i32 = arith.constant 0 : i32
    %c0_i32_0 = arith.constant 0 : i32
    %c0_i32_1 = arith.constant 0 : i32
    return %c0_i32, %c0_i32_0 : i32, i32
  }
  func.func @transform_5(%arg0: i32) -> (i32, i32) {
    %c0_i32 = arith.constant 0 : i32
    %c0_i32_0 = arith.constant 0 : i32
    return %arg0, %c0_i32 : i32, i32
  }
}

</mosaic_0001>

<llo_original>
// kernel: ngram_forward_batch.1
$region0: #{ngram_forward_batch.1}
  #allocation0 [shape = 'u32[]', space=smem, size = 0x4, offset = 0x4, fixed_abs, tag = 'smem constant byte address 0x4 - core index']
  #allocation1 [shape = 'u32[144,128]{1,0:T(1,128)}', space=vmem, size = 0x12000, scoped, tag = 'internal scratch']
  %s0 = inlined_call_operand.vmem [shape: s32[512,2], index: 0, kind: input, shape index: {}]
  %s1 = inlined_call_operand.vmem [shape: f32[2,128,128], index: 1, kind: input, shape index: {}]
  %s2 = inlined_call_operand.vmem [shape: f32[1,128], index: 2, kind: input, shape index: {}]
  %s3 = inlined_call_operand.vmem [shape: f32[128,128], index: 3, kind: input, shape index: {}]
  %s4 = inlined_call_operand.vmem [shape: f32[1,128], index: 4, kind: input, shape index: {}]
  %s5 = inlined_call_operand.hbm [shape: f32[512,128], index: 5, kind: output, shape index: {}]
  %s6 = sld [smem:[#allocation0]]
  $region53: #{ngram_forward_batch.1} parent=0
    _
  %s8 = ssub.s32 1, %s6
  %s9 = scalar_select 0, %s8, %s6
  $region1: #{ngram_forward_batch.1} parent=0
    #allocation2 [shape = 'u8[262144]{0}', space=vmem, size = 0x40000, scoped, tag = 'output window, operand 0']
    #allocation3 [shape = 's32[2]{0}', space=sflag, size = 0x8, scoped, tag = 'scoped memory for ngram_forward_batch.1']
    %10 = vsyncpa [#allocation3], 0
    %s11 = scalar_lea.sflag [#allocation3], 1
    %12 = vsyncpa %s11, 0
    loop: start=0, step=1, limit=4
    $region2: #{ngram_forward_batch.1} parent=1 // loop_pre_header
      _
    $region3: #{ngram_forward_batch.1} parent=1 // loop_header
      %s14 = sphi 0, %s18
      %p15 = scmp.ge.s32.totalorder %s14, 4
      %s24 = sphi 0, %s26
      %s27 = sphi 0, %s24
      %s28 = sphi 0, %s27
      %s44 = sphi 0, %s28
      %s48 = sphi 0, %s48
      %s50 = sphi 0, %s48
      %s51 = sphi 0, %s50
      %s65 = sphi 0, %s51
      %s69 = sphi 0, %s69
      %s71 = sphi 0, %s69
      %s72 = sphi 0, %s71
      %s86 = sphi 0, %s72
      %s90 = sphi 0, %s90
      %s92 = sphi 0, %s90
      %s93 = sphi 0, %s92
      %s107 = sphi 0, %s93
      %s111 = sphi 0, %s111
      %s113 = sphi 0, %s111
      %s114 = sphi 0, %s113
      %s128 = sphi 0, %s114
      %s134 = sphi 0, %s136
      %s137 = sphi 0, %s134
      %s138 = sphi 0, %s137
      %s154 = sphi 0, %s138
    $region4: #{ngram_forward_batch.1} parent=1 // loop_header_branch
      %17 = sbr.rel (%p15) target = $region8
    $region5: #{ngram_forward_batch.1} parent=1 // loop_body
      %s19 = ssub.s32 %s14, 1
      %s20 = ssub.s32 %s14, 2
      %s21 = sadd.s32 %s14, 1
      %s22 = ssub.s32 %s14, %s21
      %p23 = scmp.eq.s32.totalorder %s22, 0
      %s25 = sadd.s32 %s24, 1
      %s26 = scalar_select %p23, %s24, %s25
      %p29 = pneg %p23
      %p30 = scmp.eq.s32.totalorder %s14, 1
      %p31 = por %p29, %p30
      %p32 = scmp.ne.s32.totalorder %s24, %s27
      %p33 = scmp.eq.s32.totalorder %s14, 0
      %p34 = por %p32, %p33
      %p35 = scmp.ne.s32.totalorder %s24, %s27
      %p36 = scmp.eq.s32.totalorder %s19, 1
      %p37 = por %p35, %p36
      %p38 = scmp.ne.s32.totalorder %s27, %s28
      %p39 = scmp.eq.s32.totalorder %s19, 0
      %p40 = por %p38, %p39
      %p41 = scmp.ne.s32.totalorder %s27, %s28
      %p42 = scmp.eq.s32.totalorder %s20, 1
      %p43 = por %p41, %p42
      %p45 = scmp.ne.s32.totalorder %s28, %s44
      %p46 = scmp.eq.s32.totalorder %s20, 0
      %p47 = por %p45, %p46
      %s49 = sadd.s32 %s48, 1
      %p52 = scmp.eq.s32.totalorder %s14, 1
      %p53 = scmp.ne.s32.totalorder %s48, %s50
      %p54 = scmp.eq.s32.totalorder %s14, 0
      %p55 = por %p53, %p54
      %p56 = scmp.ne.s32.totalorder %s48, %s50
      %p57 = scmp.eq.s32.totalorder %s19, 1
      %p58 = por %p56, %p57
      %p59 = scmp.ne.s32.totalorder %s50, %s51
      %p60 = scmp.eq.s32.totalorder %s19, 0
      %p61 = por %p59, %p60
      %p62 = scmp.ne.s32.totalorder %s50, %s51
      %p63 = scmp.eq.s32.totalorder %s20, 1
      %p64 = por %p62, %p63
      %p66 = scmp.ne.s32.totalorder %s51, %s65
      %p67 = scmp.eq.s32.totalorder %s20, 0
      %p68 = por %p66, %p67
      %s70 = sadd.s32 %s69, 1
      %p73 = scmp.eq.s32.totalorder %s14, 1
      %p74 = scmp.ne.s32.totalorder %s69, %s71
      %p75 = scmp.eq.s32.totalorder %s14, 0
      %p76 = por %p74, %p75
      %p77 = scmp.ne.s32.totalorder %s69, %s71
      %p78 = scmp.eq.s32.totalorder %s19, 1
      %p79 = por %p77, %p78
      %p80 = scmp.ne.s32.totalorder %s71, %s72
      %p81 = scmp.eq.s32.totalorder %s19, 0
      %p82 = por %p80, %p81
      %p83 = scmp.ne.s32.totalorder %s71, %s72
      %p84 = scmp.eq.s32.totalorder %s20, 1
      %p85 = por %p83, %p84
      %p87 = scmp.ne.s32.totalorder %s72, %s86
      %p88 = scmp.eq.s32.totalorder %s20, 0
      %p89 = por %p87, %p88
      %s91 = sadd.s32 %s90, 1
      %p94 = scmp.eq.s32.totalorder %s14, 1
      %p95 = scmp.ne.s32.totalorder %s90, %s92
      %p96 = scmp.eq.s32.totalorder %s14, 0
      %p97 = por %p95, %p96
      %p98 = scmp.ne.s32.totalorder %s90, %s92
      %p99 = scmp.eq.s32.totalorder %s19, 1
      %p100 = por %p98, %p99
      %p101 = scmp.ne.s32.totalorder %s92, %s93
      %p102 = scmp.eq.s32.totalorder %s19, 0
      %p103 = por %p101, %p102
      %p104 = scmp.ne.s32.totalorder %s92, %s93
      %p105 = scmp.eq.s32.totalorder %s20, 1
      %p106 = por %p104, %p105
      %p108 = scmp.ne.s32.totalorder %s93, %s107
      %p109 = scmp.eq.s32.totalorder %s20, 0
      %p110 = por %p108, %p109
      %s112 = sadd.s32 %s111, 1
      %p115 = scmp.eq.s32.totalorder %s14, 1
      %p116 = scmp.ne.s32.totalorder %s111, %s113
      %p117 = scmp.eq.s32.totalorder %s14, 0
      %p118 = por %p116, %p117
      %p119 = scmp.ne.s32.totalorder %s111, %s113
      %p120 = scmp.eq.s32.totalorder %s19, 1
      %p121 = por %p119, %p120
      %p122 = scmp.ne.s32.totalorder %s113, %s114
      %p123 = scmp.eq.s32.totalorder %s19, 0
      %p124 = por %p122, %p123
      %p125 = scmp.ne.s32.totalorder %s113, %s114
      %p126 = scmp.eq.s32.totalorder %s20, 1
      %p127 = por %p125, %p126
      %p129 = scmp.ne.s32.totalorder %s114, %s128
      %p130 = scmp.eq.s32.totalorder %s20, 0
      %p131 = por %p129, %p130
      %s132 = ssub.s32 %s14, %s21
      %p133 = scmp.eq.s32.totalorder %s132, 0
      %s135 = sadd.s32 %s134, 1
      %s136 = scalar_select %p133, %s134, %s135
      %p139 = pneg %p133
      %p140 = scmp.eq.s32.totalorder %s14, 1
      %p141 = por %p139, %p140
      %p142 = scmp.ne.s32.totalorder %s134, %s137
      %p143 = scmp.eq.s32.totalorder %s14, 0
      %p144 = por %p142, %p143
      %p145 = scmp.ne.s32.totalorder %s134, %s137
      %p146 = scmp.eq.s32.totalorder %s19, 1
      %p147 = por %p145, %p146
      %p148 = scmp.ne.s32.totalorder %s137, %s138
      %p149 = scmp.eq.s32.totalorder %s19, 0
      %p150 = por %p148, %p149
      %p151 = scmp.ne.s32.totalorder %s137, %s138
      %p152 = scmp.eq.s32.totalorder %s20, 1
      %p153 = por %p151, %p152
      %p155 = scmp.ne.s32.totalorder %s138, %s154
      %p156 = scmp.eq.s32.totalorder %s20, 0
      %p157 = por %p155, %p156
      %p158 = scmp.le.s32.totalorder 1, %s14
      %p159 = scmp.lt.s32.totalorder %s14, 3
      %p160 = pnand %p158, %p159
      %p161 = pneg %p160
      // Predicated region
      $region9: #{ngram_forward_batch.1} parent=5 // pred_check
        _
      $region10: #{ngram_forward_batch.1} parent=5 // pred_check_branch
        %163 = sbr.rel (%p160) target = $region12
      $region11: #{ngram_forward_batch.1} parent=5 // pred_region
        %s164 = ssub.s32 %s14, 1
        // Predicated region
        $region13: #{ngram_forward_batch.1} parent=11 // pred_check
          %p165 = pneg %p61
        $region14: #{ngram_forward_batch.1} parent=11 // pred_check_branch
          %167 = sbr.rel (%p165) target = $region16
        $region15: #{ngram_forward_batch.1} parent=11 // pred_region
          _
        $region16: #{ngram_forward_batch.1} parent=11 // pred_fallthru
          _
        // Predicated region
        $region17: #{ngram_forward_batch.1} parent=11 // pred_check
          %p168 = pneg %p82
        $region18: #{ngram_forward_batch.1} parent=11 // pred_check_branch
          %170 = sbr.rel (%p168) target = $region20
        $region19: #{ngram_forward_batch.1} parent=11 // pred_region
          _
        $region20: #{ngram_forward_batch.1} parent=11 // pred_fallthru
          _
        // Predicated region
        $region21: #{ngram_forward_batch.1} parent=11 // pred_check
          %p171 = pneg %p103
        $region22: #{ngram_forward_batch.1} parent=11 // pred_check_branch
          %173 = sbr.rel (%p171) target = $region24
        $region23: #{ngram_forward_batch.1} parent=11 // pred_region
          _
        $region24: #{ngram_forward_batch.1} parent=11 // pred_fallthru
          _
        // Predicated region
        $region25: #{ngram_forward_batch.1} parent=11 // pred_check
          %p174 = pneg %p124
        $region26: #{ngram_forward_batch.1} parent=11 // pred_check_branch
          %176 = sbr.rel (%p174) target = $region28
        $region27: #{ngram_forward_batch.1} parent=11 // pred_region
          _
        $region28: #{ngram_forward_batch.1} parent=11 // pred_fallthru
          _
      $region12: #{ngram_forward_batch.1} parent=5 // pred_fallthru
        _
      %p177 = scmp.lt.s32.totalorder %s14, 2
      // Predicated region
      $region29: #{ngram_forward_batch.1} parent=5 // pred_check
        %p178 = pneg %p177
      $region30: #{ngram_forward_batch.1} parent=5 // pred_check_branch
        %180 = sbr.rel (%p178) target = $region32
      $region31: #{ngram_forward_batch.1} parent=5 // pred_region
        // Predicated region
        $region33: #{ngram_forward_batch.1} parent=31 // pred_check
          %p181 = pneg %p34
        $region34: #{ngram_forward_batch.1} parent=31 // pred_check_branch
          %183 = sbr.rel (%p181) target = $region36
        $region35: #{ngram_forward_batch.1} parent=31 // pred_region
          %s184 = smul.u32 32, %s14
          %p185 = scmp.lt.s32.totalorder %s184, 63
          %s186 = scalar_select %p185, %s184, 63
          %s187 = smul.addr %s186, 8
          %s188 = scalar_lea.vmem %s0, %s187
          %s189 = smul.u32 32, %s14
        $region36: #{ngram_forward_batch.1} parent=31 // pred_fallthru
          _
      $region32: #{ngram_forward_batch.1} parent=5 // pred_fallthru
        _
      %p190 = scmp.le.s32.totalorder 1, %s14
      %p191 = scmp.lt.s32.totalorder %s14, 3
      %p192 = pnand %p190, %p191
      %p193 = pneg %p192
      // Predicated region
      $region37: #{ngram_forward_batch.1} parent=5 // pred_check
        _
      $region38: #{ngram_forward_batch.1} parent=5 // pred_check_branch
        %195 = sbr.rel (%p192) target = $region40
      $region39: #{ngram_forward_batch.1} parent=5 // pred_region
        %s196 = ssub.s32 %s14, 1
        %s197 = smul.u32 32, %s19
        %p198 = scmp.lt.s32.totalorder %s197, 63
        %s199 = scalar_select %p198, %s197, 63
        %s200 = smul.addr %s199, 8
        %s201 = scalar_lea.vmem %s0, %s200
        %p202 = pneg %p40
        %p203 = pneg %p37
        %p204 = pneg %p61
        %p205 = pneg %p58
        %p206 = pneg %p82
        %p207 = pneg %p79
        %p208 = pneg %p103
        %p209 = pneg %p100
        %p210 = pneg %p124
        %p211 = pneg %p121
        %p212 = pneg %p150
        %p213 = pneg %p147
        %s214 = sand.u32 %s137, 1
        %s215 = scalar_lea.sflag [#allocation3], %s214
        %s216 = sand.u32 %s137, 1
        %s217 = smul.addr %s216, 256
        %s218 = scalar_lea.vmem [#allocation2], %s217
        %s219 = smul.u32 32, %s19
        %p220 = scmp.lt.s32.totalorder %s219, 63
        %s221 = scalar_select %p220, %s219, 63
        %s222 = smul.addr %s221, 8
        %s223 = scalar_lea.vmem %s0, %s222
        %s224 = smul.u32 32, %s19
        %s225 = smul.u32 32, %s19
        %v226 = vld [vmem:[%s223] sm:$0xff]
        %v227 = vld [vmem:[%s223 + $0x8] sm:$0xff]
        %v228 = vld [vmem:[%s223 + $0x10] sm:$0xff]
        %v229 = vld [vmem:[%s223 + $0x18] sm:$0xff]
        %v230 = vld [vmem:[%s223 + $0x20] sm:$0xff]
        %v231 = vld [vmem:[%s223 + $0x28] sm:$0xff]
        %v232 = vld [vmem:[%s223 + $0x30] sm:$0xff]
        %v233 = vld [vmem:[%s223 + $0x38] sm:$0xff]
        %v234 = vld [vmem:[%s223 + $0x40] sm:$0xff]
        %v235 = vld [vmem:[%s223 + $0x48] sm:$0xff]
        %v236 = vld [vmem:[%s223 + $0x50] sm:$0xff]
        %v237 = vld [vmem:[%s223 + $0x58] sm:$0xff]
        %v238 = vld [vmem:[%s223 + $0x60] sm:$0xff]
        %v239 = vld [vmem:[%s223 + $0x68] sm:$0xff]
        %v240 = vld [vmem:[%s223 + $0x70] sm:$0xff]
        %v241 = vld [vmem:[%s223 + $0x78] sm:$0xff]
        %v242 = vld [vmem:[%s223 + $0x80] sm:$0xff]
        %v243 = vld [vmem:[%s223 + $0x88] sm:$0xff]
        %v244 = vld [vmem:[%s223 + $0x90] sm:$0xff]
        %v245 = vld [vmem:[%s223 + $0x98] sm:$0xff]
        %v246 = vld [vmem:[%s223 + $0xa0] sm:$0xff]
        %v247 = vld [vmem:[%s223 + $0xa8] sm:$0xff]
        %v248 = vld [vmem:[%s223 + $0xb0] sm:$0xff]
        %v249 = vld [vmem:[%s223 + $0xb8] sm:$0xff]
        %v250 = vld [vmem:[%s223 + $0xc0] sm:$0xff]
        %v251 = vld [vmem:[%s223 + $0xc8] sm:$0xff]
        %v252 = vld [vmem:[%s223 + $0xd0] sm:$0xff]
        %v253 = vld [vmem:[%s223 + $0xd8] sm:$0xff]
        %v254 = vld [vmem:[%s223 + $0xe0] sm:$0xff]
        %v255 = vld [vmem:[%s223 + $0xe8] sm:$0xff]
        %v256 = vld [vmem:[%s223 + $0xf0] sm:$0xff]
        %v257 = vld [vmem:[%s223 + $0xf8] sm:$0xff]
        %v258 = vlaneseq
        %v259 = vand.u32 %v258, 127
        %260 = vset.pattern.permute.xlu0 0
        %261 = vperm.xlu0 %260, %v226
        %v262 = vpop.permute.xlu0 %261
        %263 = vset.pattern.permute.xlu0 0
        %264 = vperm.xlu0 %263, %v227
        %v265 = vpop.permute.xlu0 %264
        %266 = vset.pattern.permute.xlu0 0
        %267 = vperm.xlu0 %266, %v228
        %v268 = vpop.permute.xlu0 %267
        %269 = vset.pattern.permute.xlu0 0
        %270 = vperm.xlu0 %269, %v229
        %v271 = vpop.permute.xlu0 %270
        %272 = vset.pattern.permute.xlu0 0
        %273 = vperm.xlu0 %272, %v230
        %v274 = vpop.permute.xlu0 %273
        %275 = vset.pattern.permute.xlu0 0
        %276 = vperm.xlu0 %275, %v231
        %v277 = vpop.permute.xlu0 %276
        %278 = vset.pattern.permute.xlu0 0
        %279 = vperm.xlu0 %278, %v232
        %v280 = vpop.permute.xlu0 %279
        %281 = vset.pattern.permute.xlu0 0
        %282 = vperm.xlu0 %281, %v233
        %v283 = vpop.permute.xlu0 %282
        %284 = vset.pattern.permute.xlu0 0
        %285 = vperm.xlu0 %284, %v234
        %v286 = vpop.permute.xlu0 %285
        %287 = vset.pattern.permute.xlu0 0
        %288 = vperm.xlu0 %287, %v235
        %v289 = vpop.permute.xlu0 %288
        %290 = vset.pattern.permute.xlu0 0
        %291 = vperm.xlu0 %290, %v236
        %v292 = vpop.permute.xlu0 %291
        %293 = vset.pattern.permute.xlu0 0
        %294 = vperm.xlu0 %293, %v237
        %v295 = vpop.permute.xlu0 %294
        %296 = vset.pattern.permute.xlu0 0
        %297 = vperm.xlu0 %296, %v238
        %v298 = vpop.permute.xlu0 %297
        %299 = vset.pattern.permute.xlu0 0
        %300 = vperm.xlu0 %299, %v239
        %v301 = vpop.permute.xlu0 %300
        %302 = vset.pattern.permute.xlu0 0
        %303 = vperm.xlu0 %302, %v240
        %v304 = vpop.permute.xlu0 %303
        %305 = vset.pattern.permute.xlu0 0
        %306 = vperm.xlu0 %305, %v241
        %v307 = vpop.permute.xlu0 %306
        %308 = vset.pattern.permute.xlu0 0
        %309 = vperm.xlu0 %308, %v242
        %v310 = vpop.permute.xlu0 %309
        %311 = vset.pattern.permute.xlu0 0
        %312 = vperm.xlu0 %311, %v243
        %v313 = vpop.permute.xlu0 %312
        %314 = vset.pattern.permute.xlu0 0
        %315 = vperm.xlu0 %314, %v244
        %v316 = vpop.permute.xlu0 %315
        %317 = vset.pattern.permute.xlu0 0
        %318 = vperm.xlu0 %317, %v245
        %v319 = vpop.permute.xlu0 %318
        %320 = vset.pattern.permute.xlu0 0
        %321 = vperm.xlu0 %320, %v246
        %v322 = vpop.permute.xlu0 %321
        %323 = vset.pattern.permute.xlu0 0
        %324 = vperm.xlu0 %323, %v247
        %v325 = vpop.permute.xlu0 %324
        %326 = vset.pattern.permute.xlu0 0
        %327 = vperm.xlu0 %326, %v248
        %v328 = vpop.permute.xlu0 %327
        %329 = vset.pattern.permute.xlu0 0
        %330 = vperm.xlu0 %329, %v249
        %v331 = vpop.permute.xlu0 %330
        %332 = vset.pattern.permute.xlu0 0
        %333 = vperm.xlu0 %332, %v250
        %v334 = vpop.permute.xlu0 %333
        %335 = vset.pattern.permute.xlu0 0
        %336 = vperm.xlu0 %335, %v251
        %v337 = vpop.permute.xlu0 %336
        %338 = vset.pattern.permute.xlu0 0
        %339 = vperm.xlu0 %338, %v252
        %v340 = vpop.permute.xlu0 %339
        %341 = vset.pattern.permute.xlu0 0
        %342 = vperm.xlu0 %341, %v253
        %v343 = vpop.permute.xlu0 %342
        %344 = vset.pattern.permute.xlu0 0
        %345 = vperm.xlu0 %344, %v254
        %v346 = vpop.permute.xlu0 %345
        %347 = vset.pattern.permute.xlu0 0
        %348 = vperm.xlu0 %347, %v255
        %v349 = vpop.permute.xlu0 %348
        %350 = vset.pattern.permute.xlu0 0
        %351 = vperm.xlu0 %350, %v256
        %v352 = vpop.permute.xlu0 %351
        %353 = vset.pattern.permute.xlu0 0
        %354 = vperm.xlu0 %353, %v257
        %v355 = vpop.permute.xlu0 %354
        %vm356 = vcmp.eq.s32.totalorder %v259, %v262
        %vm357 = vcmp.eq.s32.totalorder %v259, %v265
        %vm358 = vcmp.eq.s32.totalorder %v259, %v268
        %vm359 = vcmp.eq.s32.totalorder %v259, %v271
        %vm360 = vcmp.eq.s32.totalorder %v259, %v274
        %vm361 = vcmp.eq.s32.totalorder %v259, %v277
        %vm362 = vcmp.eq.s32.totalorder %v259, %v280
        %vm363 = vcmp.eq.s32.totalorder %v259, %v283
        %vm364 = vcmp.eq.s32.totalorder %v259, %v286
        %vm365 = vcmp.eq.s32.totalorder %v259, %v289
        %vm366 = vcmp.eq.s32.totalorder %v259, %v292
        %vm367 = vcmp.eq.s32.totalorder %v259, %v295
        %vm368 = vcmp.eq.s32.totalorder %v259, %v298
        %vm369 = vcmp.eq.s32.totalorder %v259, %v301
        %vm370 = vcmp.eq.s32.totalorder %v259, %v304
        %vm371 = vcmp.eq.s32.totalorder %v259, %v307
        %vm372 = vcmp.eq.s32.totalorder %v259, %v310
        %vm373 = vcmp.eq.s32.totalorder %v259, %v313
        %vm374 = vcmp.eq.s32.totalorder %v259, %v316
        %vm375 = vcmp.eq.s32.totalorder %v259, %v319
        %vm376 = vcmp.eq.s32.totalorder %v259, %v322
        %vm377 = vcmp.eq.s32.totalorder %v259, %v325
        %vm378 = vcmp.eq.s32.totalorder %v259, %v328
        %vm379 = vcmp.eq.s32.totalorder %v259, %v331
        %vm380 = vcmp.eq.s32.totalorder %v259, %v334
        %vm381 = vcmp.eq.s32.totalorder %v259, %v337
        %vm382 = vcmp.eq.s32.totalorder %v259, %v340
        %vm383 = vcmp.eq.s32.totalorder %v259, %v343
        %vm384 = vcmp.eq.s32.totalorder %v259, %v346
        %vm385 = vcmp.eq.s32.totalorder %v259, %v349
        %vm386 = vcmp.eq.s32.totalorder %v259, %v352
        %vm387 = vcmp.eq.s32.totalorder %v259, %v355
        %v388 = vsel %vm356, 1, 0
        %v389 = vsel %vm357, 1, 0
        %v390 = vsel %vm358, 1, 0
        %v391 = vsel %vm359, 1, 0
        %v392 = vsel %vm360, 1, 0
        %v393 = vsel %vm361, 1, 0
        %v394 = vsel %vm362, 1, 0
        %v395 = vsel %vm363, 1, 0
        %v396 = vsel %vm364, 1, 0
        %v397 = vsel %vm365, 1, 0
        %v398 = vsel %vm366, 1, 0
        %v399 = vsel %vm367, 1, 0
        %v400 = vsel %vm368, 1, 0
        %v401 = vsel %vm369, 1, 0
        %v402 = vsel %vm370, 1, 0
        %v403 = vsel %vm371, 1, 0
        %v404 = vsel %vm372, 1, 0
        %v405 = vsel %vm373, 1, 0
        %v406 = vsel %vm374, 1, 0
        %v407 = vsel %vm375, 1, 0
        %v408 = vsel %vm376, 1, 0
        %v409 = vsel %vm377, 1, 0
        %v410 = vsel %vm378, 1, 0
        %v411 = vsel %vm379, 1, 0
        %v412 = vsel %vm380, 1, 0
        %v413 = vsel %vm381, 1, 0
        %v414 = vsel %vm382, 1, 0
        %v415 = vsel %vm383, 1, 0
        %v416 = vsel %vm384, 1, 0
        %v417 = vsel %vm385, 1, 0
        %v418 = vsel %vm386, 1, 0
        %v419 = vsel %vm387, 1, 0
        %v420 = vcvt.s32.f32 %v388
        %v421 = vcvt.s32.f32 %v389
        %v422 = vcvt.s32.f32 %v390
        %v423 = vcvt.s32.f32 %v391
        %v424 = vcvt.s32.f32 %v392
        %v425 = vcvt.s32.f32 %v393
        %v426 = vcvt.s32.f32 %v394
        %v427 = vcvt.s32.f32 %v395
        %v428 = vcvt.s32.f32 %v396
        %v429 = vcvt.s32.f32 %v397
        %v430 = vcvt.s32.f32 %v398
        %v431 = vcvt.s32.f32 %v399
        %v432 = vcvt.s32.f32 %v400
        %v433 = vcvt.s32.f32 %v401
        %v434 = vcvt.s32.f32 %v402
        %v435 = vcvt.s32.f32 %v403
        %v436 = vcvt.s32.f32 %v404
        %v437 = vcvt.s32.f32 %v405
        %v438 = vcvt.s32.f32 %v406
        %v439 = vcvt.s32.f32 %v407
        %v440 = vcvt.s32.f32 %v408
        %v441 = vcvt.s32.f32 %v409
        %v442 = vcvt.s32.f32 %v410
        %v443 = vcvt.s32.f32 %v411
        %v444 = vcvt.s32.f32 %v412
        %v445 = vcvt.s32.f32 %v413
        %v446 = vcvt.s32.f32 %v414
        %v447 = vcvt.s32.f32 %v415
        %v448 = vcvt.s32.f32 %v416
        %v449 = vcvt.s32.f32 %v417
        %v450 = vcvt.s32.f32 %v418
        %v451 = vcvt.s32.f32 %v419
        %v452 = vld [vmem:[%s1] sm:$0xff]
        %v453 = vld [vmem:[%s1 + $0x8] sm:$0xff]
        %v454 = vld [vmem:[%s1 + $0x10] sm:$0xff]
        %v455 = vld [vmem:[%s1 + $0x18] sm:$0xff]
        %v456 = vld [vmem:[%s1 + $0x20] sm:$0xff]
        %v457 = vld [vmem:[%s1 + $0x28] sm:$0xff]
        %v458 = vld [vmem:[%s1 + $0x30] sm:$0xff]
        %v459 = vld [vmem:[%s1 + $0x38] sm:$0xff]
        %v460 = vld [vmem:[%s1 + $0x40] sm:$0xff]
        %v461 = vld [vmem:[%s1 + $0x48] sm:$0xff]
        %v462 = vld [vmem:[%s1 + $0x50] sm:$0xff]
        %v463 = vld [vmem:[%s1 + $0x58] sm:$0xff]
        %v464 = vld [vmem:[%s1 + $0x60] sm:$0xff]
        %v465 = vld [vmem:[%s1 + $0x68] sm:$0xff]
        %v466 = vld [vmem:[%s1 + $0x70] sm:$0xff]
        %v467 = vld [vmem:[%s1 + $0x78] sm:$0xff]
        %468 = vset.pattern.permute.xlu0 1
        %469 = vperm.xlu0 %468, %v226
        %v470 = vpop.permute.xlu0 %469
        %471 = vset.pattern.permute.xlu0 1
        %472 = vperm.xlu0 %471, %v227
        %v473 = vpop.permute.xlu0 %472
        %474 = vset.pattern.permute.xlu0 1
        %475 = vperm.xlu0 %474, %v228
        %v476 = vpop.permute.xlu0 %475
        %477 = vset.pattern.permute.xlu0 1
        %478 = vperm.xlu0 %477, %v229
        %v479 = vpop.permute.xlu0 %478
        %480 = vset.pattern.permute.xlu0 1
        %481 = vperm.xlu0 %480, %v230
        %v482 = vpop.permute.xlu0 %481
        %483 = vset.pattern.permute.xlu0 1
        %484 = vperm.xlu0 %483, %v231
        %v485 = vpop.permute.xlu0 %484
        %486 = vset.pattern.permute.xlu0 1
        %487 = vperm.xlu0 %486, %v232
        %v488 = vpop.permute.xlu0 %487
        %489 = vset.pattern.permute.xlu0 1
        %490 = vperm.xlu0 %489, %v233
        %v491 = vpop.permute.xlu0 %490
        %492 = vset.pattern.permute.xlu0 1
        %493 = vperm.xlu0 %492, %v234
        %v494 = vpop.permute.xlu0 %493
        %495 = vset.pattern.permute.xlu0 1
        %496 = vperm.xlu0 %495, %v235
        %v497 = vpop.permute.xlu0 %496
        %498 = vset.pattern.permute.xlu0 1
        %499 = vperm.xlu0 %498, %v236
        %v500 = vpop.permute.xlu0 %499
        %501 = vset.pattern.permute.xlu0 1
        %502 = vperm.xlu0 %501, %v237
        %v503 = vpop.permute.xlu0 %502
        %504 = vset.pattern.permute.xlu0 1
        %505 = vperm.xlu0 %504, %v238
        %v506 = vpop.permute.xlu0 %505
        %507 = vset.pattern.permute.xlu0 1
        %508 = vperm.xlu0 %507, %v239
        %v509 = vpop.permute.xlu0 %508
        %510 = vset.pattern.permute.xlu0 1
        %511 = vperm.xlu0 %510, %v240
        %v512 = vpop.permute.xlu0 %511
        %513 = vset.pattern.permute.xlu0 1
        %514 = vperm.xlu0 %513, %v241
        %v515 = vpop.permute.xlu0 %514
        %516 = vset.pattern.permute.xlu0 1
        %517 = vperm.xlu0 %516, %v242
        %v518 = vpop.permute.xlu0 %517
        %519 = vset.pattern.permute.xlu0 1
        %520 = vperm.xlu0 %519, %v243
        %v521 = vpop.permute.xlu0 %520
        %522 = vset.pattern.permute.xlu0 1
        %523 = vperm.xlu0 %522, %v244
        %v524 = vpop.permute.xlu0 %523
        %525 = vset.pattern.permute.xlu0 1
        %526 = vperm.xlu0 %525, %v245
        %v527 = vpop.permute.xlu0 %526
        %528 = vset.pattern.permute.xlu0 1
        %529 = vperm.xlu0 %528, %v246
        %v530 = vpop.permute.xlu0 %529
        %531 = vset.pattern.permute.xlu0 1
        %532 = vperm.xlu0 %531, %v247
        %v533 = vpop.permute.xlu0 %532
        %534 = vset.pattern.permute.xlu0 1
        %535 = vperm.xlu0 %534, %v248
        %v536 = vpop.permute.xlu0 %535
        %537 = vset.pattern.permute.xlu0 1
        %538 = vperm.xlu0 %537, %v249
        %v539 = vpop.permute.xlu0 %538
        %540 = vset.pattern.permute.xlu0 1
        %541 = vperm.xlu0 %540, %v250
        %v542 = vpop.permute.xlu0 %541
        %543 = vset.pattern.permute.xlu0 1
        %544 = vperm.xlu0 %543, %v251
        %v545 = vpop.permute.xlu0 %544
        %546 = vset.pattern.permute.xlu0 1
        %547 = vperm.xlu0 %546, %v252
        %v548 = vpop.permute.xlu0 %547
        %549 = vset.pattern.permute.xlu0 1
        %550 = vperm.xlu0 %549, %v253
        %v551 = vpop.permute.xlu0 %550
        %552 = vset.pattern.permute.xlu0 1
        %553 = vperm.xlu0 %552, %v254
        %v554 = vpop.permute.xlu0 %553
        %555 = vset.pattern.permute.xlu0 1
        %556 = vperm.xlu0 %555, %v255
        %v557 = vpop.permute.xlu0 %556
        %558 = vset.pattern.permute.xlu0 1
        %559 = vperm.xlu0 %558, %v256
        %v560 = vpop.permute.xlu0 %559
        %561 = vset.pattern.permute.xlu0 1
        %562 = vperm.xlu0 %561, %v257
        %v563 = vpop.permute.xlu0 %562
        %vm564 = vcmp.eq.s32.totalorder %v259, %v470
        %vm565 = vcmp.eq.s32.totalorder %v259, %v473
        %vm566 = vcmp.eq.s32.totalorder %v259, %v476
        %vm567 = vcmp.eq.s32.totalorder %v259, %v479
        %vm568 = vcmp.eq.s32.totalorder %v259, %v482
        %vm569 = vcmp.eq.s32.totalorder %v259, %v485
        %vm570 = vcmp.eq.s32.totalorder %v259, %v488
        %vm571 = vcmp.eq.s32.totalorder %v259, %v491
        %vm572 = vcmp.eq.s32.totalorder %v259, %v494
        %vm573 = vcmp.eq.s32.totalorder %v259, %v497
        %vm574 = vcmp.eq.s32.totalorder %v259, %v500
        %vm575 = vcmp.eq.s32.totalorder %v259, %v503
        %vm576 = vcmp.eq.s32.totalorder %v259, %v506
        %vm577 = vcmp.eq.s32.totalorder %v259, %v509
        %vm578 = vcmp.eq.s32.totalorder %v259, %v512
        %vm579 = vcmp.eq.s32.totalorder %v259, %v515
        %vm580 = vcmp.eq.s32.totalorder %v259, %v518
        %vm581 = vcmp.eq.s32.totalorder %v259, %v521
        %vm582 = vcmp.eq.s32.totalorder %v259, %v524
        %vm583 = vcmp.eq.s32.totalorder %v259, %v527
        %vm584 = vcmp.eq.s32.totalorder %v259, %v530
        %vm585 = vcmp.eq.s32.totalorder %v259, %v533
        %vm586 = vcmp.eq.s32.totalorder %v259, %v536
        %vm587 = vcmp.eq.s32.totalorder %v259, %v539
        %vm588 = vcmp.eq.s32.totalorder %v259, %v542
        %vm589 = vcmp.eq.s32.totalorder %v259, %v545
        %vm590 = vcmp.eq.s32.totalorder %v259, %v548
        %vm591 = vcmp.eq.s32.totalorder %v259, %v551
        %vm592 = vcmp.eq.s32.totalorder %v259, %v554
        %vm593 = vcmp.eq.s32.totalorder %v259, %v557
        %vm594 = vcmp.eq.s32.totalorder %v259, %v560
        %vm595 = vcmp.eq.s32.totalorder %v259, %v563
        %v596 = vsel %vm564, 1, 0
        %v597 = vsel %vm565, 1, 0
        %v598 = vsel %vm566, 1, 0
        %v599 = vsel %vm567, 1, 0
        %v600 = vsel %vm568, 1, 0
        %v601 = vsel %vm569, 1, 0
        %v602 = vsel %vm570, 1, 0
        %v603 = vsel %vm571, 1, 0
        %v604 = vsel %vm572, 1, 0
        %v605 = vsel %vm573, 1, 0
        %v606 = vsel %vm574, 1, 0
        %v607 = vsel %vm575, 1, 0
        %v608 = vsel %vm576, 1, 0
        %v609 = vsel %vm577, 1, 0
        %v610 = vsel %vm578, 1, 0
        %v611 = vsel %vm579, 1, 0
        %v612 = vsel %vm580, 1, 0
        %v613 = vsel %vm581, 1, 0
        %v614 = vsel %vm582, 1, 0
        %v615 = vsel %vm583, 1, 0
        %v616 = vsel %vm584, 1, 0
        %v617 = vsel %vm585, 1, 0
        %v618 = vsel %vm586, 1, 0
        %v619 = vsel %vm587, 1, 0
        %v620 = vsel %vm588, 1, 0
        %v621 = vsel %vm589, 1, 0
        %v622 = vsel %vm590, 1, 0
        %v623 = vsel %vm591, 1, 0
        %v624 = vsel %vm592, 1, 0
        %v625 = vsel %vm593, 1, 0
        %v626 = vsel %vm594, 1, 0
        %v627 = vsel %vm595, 1, 0
        %v628 = vcvt.s32.f32 %v596
        %v629 = vcvt.s32.f32 %v597
        %v630 = vcvt.s32.f32 %v598
        %v631 = vcvt.s32.f32 %v599
        %v632 = vcvt.s32.f32 %v600
        %v633 = vcvt.s32.f32 %v601
        %v634 = vcvt.s32.f32 %v602
        %v635 = vcvt.s32.f32 %v603
        %v636 = vcvt.s32.f32 %v604
        %v637 = vcvt.s32.f32 %v605
        %v638 = vcvt.s32.f32 %v606
        %v639 = vcvt.s32.f32 %v607
        %v640 = vcvt.s32.f32 %v608
        %v641 = vcvt.s32.f32 %v609
        %v642 = vcvt.s32.f32 %v610
        %v643 = vcvt.s32.f32 %v611
        %v644 = vcvt.s32.f32 %v612
        %v645 = vcvt.s32.f32 %v613
        %v646 = vcvt.s32.f32 %v614
        %v647 = vcvt.s32.f32 %v615
        %v648 = vcvt.s32.f32 %v616
        %v649 = vcvt.s32.f32 %v617
        %v650 = vcvt.s32.f32 %v618
        %v651 = vcvt.s32.f32 %v619
        %v652 = vcvt.s32.f32 %v620
        %v653 = vcvt.s32.f32 %v621
        %v654 = vcvt.s32.f32 %v622
        %v655 = vcvt.s32.f32 %v623
        %v656 = vcvt.s32.f32 %v624
        %v657 = vcvt.s32.f32 %v625
        %v658 = vcvt.s32.f32 %v626
        %v659 = vcvt.s32.f32 %v627
        %s660 = scalar_lea.vmem %s1, 128
        %v661 = vld [vmem:[%s660] sm:$0xff]
        %v662 = vld [vmem:[%s660 + $0x8] sm:$0xff]
        %v663 = vld [vmem:[%s660 + $0x10] sm:$0xff]
        %v664 = vld [vmem:[%s660 + $0x18] sm:$0xff]
        %v665 = vld [vmem:[%s660 + $0x20] sm:$0xff]
        %v666 = vld [vmem:[%s660 + $0x28] sm:$0xff]
        %v667 = vld [vmem:[%s660 + $0x30] sm:$0xff]
        %v668 = vld [vmem:[%s660 + $0x38] sm:$0xff]
        %v669 = vld [vmem:[%s660 + $0x40] sm:$0xff]
        %v670 = vld [vmem:[%s660 + $0x48] sm:$0xff]
        %v671 = vld [vmem:[%s660 + $0x50] sm:$0xff]
        %v672 = vld [vmem:[%s660 + $0x58] sm:$0xff]
        %v673 = vld [vmem:[%s660 + $0x60] sm:$0xff]
        %v674 = vld [vmem:[%s660 + $0x68] sm:$0xff]
        %v675 = vld [vmem:[%s660 + $0x70] sm:$0xff]
        %v676 = vld [vmem:[%s660 + $0x78] sm:$0xff]
        %677 = vmatprep.subr.mxu0 0.0
        %678 = vmatpush1.msra.mxu0 %v676
        %679 = vmatprep.subr.mxu0 0.0
        %680 = vmatpush1.msra.mxu0 %v675
        %681 = vmatprep.subr.mxu0 0.0
        %682 = vmatpush1.msra.mxu0 %v674
        %683 = vmatprep.subr.mxu0 0.0
        %684 = vmatpush1.msra.mxu0 %v673
        %685 = vmatprep.subr.mxu0 0.0
        %686 = vmatpush1.msra.mxu0 %v672
        %687 = vmatprep.subr.mxu0 0.0
        %688 = vmatpush1.msra.mxu0 %v671
        %689 = vmatprep.subr.mxu0 0.0
        %690 = vmatpush1.msra.mxu0 %v670
        %691 = vmatprep.subr.mxu0 0.0
        %692 = vmatpush1.msra.mxu0 %v669
        %693 = vmatprep.subr.mxu0 0.0
        %694 = vmatpush1.msra.mxu0 %v668
        %695 = vmatprep.subr.mxu0 0.0
        %696 = vmatpush1.msra.mxu0 %v667
        %697 = vmatprep.subr.mxu0 0.0
        %698 = vmatpush1.msra.mxu0 %v666
        %699 = vmatprep.subr.mxu0 0.0
        %700 = vmatpush1.msra.mxu0 %v665
        %701 = vmatprep.subr.mxu0 0.0
        %702 = vmatpush1.msra.mxu0 %v664
        %703 = vmatprep.subr.mxu0 0.0
        %704 = vmatpush1.msra.mxu0 %v663
        %705 = vmatprep.subr.mxu0 0.0
        %706 = vmatpush1.msra.mxu0 %v662
        %707 = vmatprep.subr.mxu0 0.0
        %708 = vmatpush1.msra.mxu0 %v661
        %709 = vmatprep.subr.mxu0 0.0
        %710 = vmatpush2.msra.mxu0 0.0
        %711 = vmatprep.subr.mxu0 0.0
        %712 = vmatpush2.msra.mxu0 0.0
        %713 = vmatprep.subr.mxu0 0.0
        %714 = vmatpush2.msra.mxu0 0.0
        %715 = vmatprep.subr.mxu0 0.0
        %716 = vmatpush2.msra.mxu0 0.0
        %717 = vmatprep.subr.mxu0 0.0
        %718 = vmatpush2.msra.mxu0 0.0
        %719 = vmatprep.subr.mxu0 0.0
        %720 = vmatpush2.msra.mxu0 0.0
        %721 = vmatprep.subr.mxu0 0.0
        %722 = vmatpush2.msra.mxu0 0.0
        %723 = vmatprep.subr.mxu0 0.0
        %724 = vmatpush2.msra.mxu0 0.0
        %725 = vmatprep.subr.mxu0 0.0
        %726 = vmatpush2.msra.mxu0 0.0
        %727 = vmatprep.subr.mxu0 0.0
        %728 = vmatpush2.msra.mxu0 0.0
        %729 = vmatprep.subr.mxu0 0.0
        %730 = vmatpush2.msra.mxu0 0.0
        %731 = vmatprep.subr.mxu0 0.0
        %732 = vmatpush2.msra.mxu0 0.0
        %733 = vmatprep.subr.mxu0 0.0
        %734 = vmatpush2.msra.mxu0 0.0
        %735 = vmatprep.subr.mxu0 0.0
        %736 = vmatpush2.msra.mxu0 0.0
        %737 = vmatprep.subr.mxu0 0.0
        %738 = vmatpush2.msra.mxu0 0.0
        %739 = vmatprep.subr.mxu0 0.0
        %740 = vmatpush2.msra.mxu0 0.0
        %741 = vmatprep.mubr.f32.mxu0 0.0
        %742 = vmatmul.mubr.f32.gmra.mxu0 %v628
        %v743 = vpop.f32.mrf.mxu0
        %v744 = vadd.f32 0.0, %v743
        %v745 = vpop.f32.mrf.mxu0
        %746 = vmatprep.mubr.f32.mxu0 0.0
        %747 = vmatmul.mubr.f32.gmra.mxu0 %v629
        %v748 = vpop.f32.mrf.mxu0
        %v749 = vadd.f32 0.0, %v748
        %v750 = vpop.f32.mrf.mxu0
        %751 = vmatprep.mubr.f32.mxu0 0.0
        %752 = vmatmul.mubr.f32.gmra.mxu0 %v630
        %v753 = vpop.f32.mrf.mxu0
        %v754 = vadd.f32 0.0, %v753
        %v755 = vpop.f32.mrf.mxu0
        %756 = vmatprep.mubr.f32.mxu0 0.0
        %757 = vmatmul.mubr.f32.gmra.mxu0 %v631
        %v758 = vpop.f32.mrf.mxu0
        %v759 = vadd.f32 0.0, %v758
        %v760 = vpop.f32.mrf.mxu0
        %761 = vmatprep.mubr.f32.mxu0 0.0
        %762 = vmatmul.mubr.f32.gmra.mxu0 %v632
        %v763 = vpop.f32.mrf.mxu0
        %v764 = vadd.f32 0.0, %v763
        %v765 = vpop.f32.mrf.mxu0
        %766 = vmatprep.mubr.f32.mxu0 0.0
        %767 = vmatmul.mubr.f32.gmra.mxu0 %v633
        %v768 = vpop.f32.mrf.mxu0
        %v769 = vadd.f32 0.0, %v768
        %v770 = vpop.f32.mrf.mxu0
        %771 = vmatprep.mubr.f32.mxu0 0.0
        %772 = vmatmul.mubr.f32.gmra.mxu0 %v634
        %v773 = vpop.f32.mrf.mxu0
        %v774 = vadd.f32 0.0, %v773
        %v775 = vpop.f32.mrf.mxu0
        %776 = vmatprep.mubr.f32.mxu0 0.0
        %777 = vmatmul.mubr.f32.gmra.mxu0 %v635
        %v778 = vpop.f32.mrf.mxu0
        %v779 = vadd.f32 0.0, %v778
        %v780 = vpop.f32.mrf.mxu0
        %781 = vmatprep.mubr.f32.mxu0 0.0
        %782 = vmatmul.mubr.f32.gmra.mxu0 %v636
        %v783 = vpop.f32.mrf.mxu0
        %v784 = vadd.f32 0.0, %v783
        %v785 = vpop.f32.mrf.mxu0
        %786 = vmatprep.mubr.f32.mxu0 0.0
        %787 = vmatmul.mubr.f32.gmra.mxu0 %v637
        %v788 = vpop.f32.mrf.mxu0
        %v789 = vadd.f32 0.0, %v788
        %v790 = vpop.f32.mrf.mxu0
        %791 = vmatprep.mubr.f32.mxu0 0.0
        %792 = vmatmul.mubr.f32.gmra.mxu0 %v638
        %v793 = vpop.f32.mrf.mxu0
        %v794 = vadd.f32 0.0, %v793
        %v795 = vpop.f32.mrf.mxu0
        %796 = vmatprep.mubr.f32.mxu0 0.0
        %797 = vmatmul.mubr.f32.gmra.mxu0 %v639
        %v798 = vpop.f32.mrf.mxu0
        %v799 = vadd.f32 0.0, %v798
        %v800 = vpop.f32.mrf.mxu0
        %801 = vmatprep.mubr.f32.mxu0 0.0
        %802 = vmatmul.mubr.f32.gmra.mxu0 %v640
        %v803 = vpop.f32.mrf.mxu0
        %v804 = vadd.f32 0.0, %v803
        %v805 = vpop.f32.mrf.mxu0
        %806 = vmatprep.mubr.f32.mxu0 0.0
        %807 = vmatmul.mubr.f32.gmra.mxu0 %v641
        %v808 = vpop.f32.mrf.mxu0
        %v809 = vadd.f32 0.0, %v808
        %v810 = vpop.f32.mrf.mxu0
        %811 = vmatprep.mubr.f32.mxu0 0.0
        %812 = vmatmul.mubr.f32.gmra.mxu0 %v642
        %v813 = vpop.f32.mrf.mxu0
        %v814 = vadd.f32 0.0, %v813
        %v815 = vpop.f32.mrf.mxu0
        %816 = vmatprep.mubr.f32.mxu0 0.0
        %817 = vmatmul.mubr.f32.gmra.mxu0 %v643
        %v818 = vpop.f32.mrf.mxu0
        %v819 = vadd.f32 0.0, %v818
        %v820 = vpop.f32.mrf.mxu0
        %821 = vmatprep.mubr.f32.mxu0 0.0
        %822 = vmatmul.mubr.f32.gmra.mxu0 %v644
        %v823 = vpop.f32.mrf.mxu0
        %v824 = vadd.f32 0.0, %v823
        %v825 = vpop.f32.mrf.mxu0
        %826 = vmatprep.mubr.f32.mxu0 0.0
        %827 = vmatmul.mubr.f32.gmra.mxu0 %v645
        %v828 = vpop.f32.mrf.mxu0
        %v829 = vadd.f32 0.0, %v828
        %v830 = vpop.f32.mrf.mxu0
        %831 = vmatprep.mubr.f32.mxu0 0.0
        %832 = vmatmul.mubr.f32.gmra.mxu0 %v646
        %v833 = vpop.f32.mrf.mxu0
        %v834 = vadd.f32 0.0, %v833
        %v835 = vpop.f32.mrf.mxu0
        %836 = vmatprep.mubr.f32.mxu0 0.0
        %837 = vmatmul.mubr.f32.gmra.mxu0 %v647
        %v838 = vpop.f32.mrf.mxu0
        %v839 = vadd.f32 0.0, %v838
        %v840 = vpop.f32.mrf.mxu0
        %841 = vmatprep.mubr.f32.mxu0 0.0
        %842 = vmatmul.mubr.f32.gmra.mxu0 %v648
        %v843 = vpop.f32.mrf.mxu0
        %v844 = vadd.f32 0.0, %v843
        %v845 = vpop.f32.mrf.mxu0
        %846 = vmatprep.mubr.f32.mxu0 0.0
        %847 = vmatmul.mubr.f32.gmra.mxu0 %v649
        %v848 = vpop.f32.mrf.mxu0
        %v849 = vadd.f32 0.0, %v848
        %v850 = vpop.f32.mrf.mxu0
        %851 = vmatprep.mubr.f32.mxu0 0.0
        %852 = vmatmul.mubr.f32.gmra.mxu0 %v650
        %v853 = vpop.f32.mrf.mxu0
        %v854 = vadd.f32 0.0, %v853
        %v855 = vpop.f32.mrf.mxu0
        %856 = vmatprep.mubr.f32.mxu0 0.0
        %857 = vmatmul.mubr.f32.gmra.mxu0 %v651
        %v858 = vpop.f32.mrf.mxu0
        %v859 = vadd.f32 0.0, %v858
        %v860 = vpop.f32.mrf.mxu0
        %861 = vmatprep.mubr.f32.mxu0 0.0
        %862 = vmatmul.mubr.f32.gmra.mxu0 %v652
        %v863 = vpop.f32.mrf.mxu0
        %v864 = vadd.f32 0.0, %v863
        %v865 = vpop.f32.mrf.mxu0
        %866 = vmatprep.mubr.f32.mxu0 0.0
        %867 = vmatmul.mubr.f32.gmra.mxu0 %v653
        %v868 = vpop.f32.mrf.mxu0
        %v869 = vadd.f32 0.0, %v868
        %v870 = vpop.f32.mrf.mxu0
        %871 = vmatprep.mubr.f32.mxu0 0.0
        %872 = vmatmul.mubr.f32.gmra.mxu0 %v654
        %v873 = vpop.f32.mrf.mxu0
        %v874 = vadd.f32 0.0, %v873
        %v875 = vpop.f32.mrf.mxu0
        %876 = vmatprep.mubr.f32.mxu0 0.0
        %877 = vmatmul.mubr.f32.gmra.mxu0 %v655
        %v878 = vpop.f32.mrf.mxu0
        %v879 = vadd.f32 0.0, %v878
        %v880 = vpop.f32.mrf.mxu0
        %881 = vmatprep.mubr.f32.mxu0 0.0
        %882 = vmatmul.mubr.f32.gmra.mxu0 %v656
        %v883 = vpop.f32.mrf.mxu0
        %v884 = vadd.f32 0.0, %v883
        %v885 = vpop.f32.mrf.mxu0
        %886 = vmatprep.mubr.f32.mxu0 0.0
        %887 = vmatmul.mubr.f32.gmra.mxu0 %v657
        %v888 = vpop.f32.mrf.mxu0
        %v889 = vadd.f32 0.0, %v888
        %v890 = vpop.f32.mrf.mxu0
        %891 = vmatprep.mubr.f32.mxu0 0.0
        %892 = vmatmul.mubr.f32.gmra.mxu0 %v658
        %v893 = vpop.f32.mrf.mxu0
        %v894 = vadd.f32 0.0, %v893
        %v895 = vpop.f32.mrf.mxu0
        %896 = vmatprep.mubr.f32.mxu0 0.0
        %897 = vmatmul.mubr.f32.gmra.mxu0 %v659
        %v898 = vpop.f32.mrf.mxu0
        %v899 = vadd.f32 0.0, %v898
        %v900 = vpop.f32.mrf.mxu0
        %901 = vdwg.mxu0
        %902 = vmatprep.subr.mxu0 0.0
        %903 = vmatpush1.msra.mxu0 %v467
        %904 = vmatprep.subr.mxu0 0.0
        %905 = vmatpush1.msra.mxu0 %v466
        %906 = vmatprep.subr.mxu0 0.0
        %907 = vmatpush1.msra.mxu0 %v465
        %908 = vmatprep.subr.mxu0 0.0
        %909 = vmatpush1.msra.mxu0 %v464
        %910 = vmatprep.subr.mxu0 0.0
        %911 = vmatpush1.msra.mxu0 %v463
        %912 = vmatprep.subr.mxu0 0.0
        %913 = vmatpush1.msra.mxu0 %v462
        %914 = vmatprep.subr.mxu0 0.0
        %915 = vmatpush1.msra.mxu0 %v461
        %916 = vmatprep.subr.mxu0 0.0
        %917 = vmatpush1.msra.mxu0 %v460
        %918 = vmatprep.subr.mxu0 0.0
        %919 = vmatpush1.msra.mxu0 %v459
        %920 = vmatprep.subr.mxu0 0.0
        %921 = vmatpush1.msra.mxu0 %v458
        %922 = vmatprep.subr.mxu0 0.0
        %923 = vmatpush1.msra.mxu0 %v457
        %924 = vmatprep.subr.mxu0 0.0
        %925 = vmatpush1.msra.mxu0 %v456
        %926 = vmatprep.subr.mxu0 0.0
        %927 = vmatpush1.msra.mxu0 %v455
        %928 = vmatprep.subr.mxu0 0.0
        %929 = vmatpush1.msra.mxu0 %v454
        %930 = vmatprep.subr.mxu0 0.0
        %931 = vmatpush1.msra.mxu0 %v453
        %932 = vmatprep.subr.mxu0 0.0
        %933 = vmatpush1.msra.mxu0 %v452
        %934 = vmatprep.subr.mxu0 0.0
        %935 = vmatpush2.msra.mxu0 0.0
        %936 = vmatprep.subr.mxu0 0.0
        %937 = vmatpush2.msra.mxu0 0.0
        %938 = vmatprep.subr.mxu0 0.0
        %939 = vmatpush2.msra.mxu0 0.0
        %940 = vmatprep.subr.mxu0 0.0
        %941 = vmatpush2.msra.mxu0 0.0
        %942 = vmatprep.subr.mxu0 0.0
        %943 = vmatpush2.msra.mxu0 0.0
        %944 = vmatprep.subr.mxu0 0.0
        %945 = vmatpush2.msra.mxu0 0.0
        %946 = vmatprep.subr.mxu0 0.0
        %947 = vmatpush2.msra.mxu0 0.0
        %948 = vmatprep.subr.mxu0 0.0
        %949 = vmatpush2.msra.mxu0 0.0
        %950 = vmatprep.subr.mxu0 0.0
        %951 = vmatpush2.msra.mxu0 0.0
        %952 = vmatprep.subr.mxu0 0.0
        %953 = vmatpush2.msra.mxu0 0.0
        %954 = vmatprep.subr.mxu0 0.0
        %955 = vmatpush2.msra.mxu0 0.0
        %956 = vmatprep.subr.mxu0 0.0
        %957 = vmatpush2.msra.mxu0 0.0
        %958 = vmatprep.subr.mxu0 0.0
        %959 = vmatpush2.msra.mxu0 0.0
        %960 = vmatprep.subr.mxu0 0.0
        %961 = vmatpush2.msra.mxu0 0.0
        %962 = vmatprep.subr.mxu0 0.0
        %963 = vmatpush2.msra.mxu0 0.0
        %964 = vmatprep.subr.mxu0 0.0
        %965 = vmatpush2.msra.mxu0 0.0
        %966 = vmatprep.mubr.f32.mxu0 0.0
        %967 = vmatmul.mubr.f32.gmra.mxu0 %v420
        %v968 = vpop.f32.mrf.mxu0
        %v969 = vadd.f32 %v744, %v968
        %v970 = vpop.f32.mrf.mxu0
        %971 = vmatprep.mubr.f32.mxu0 0.0
        %972 = vmatmul.mubr.f32.gmra.mxu0 %v421
        %v973 = vpop.f32.mrf.mxu0
        %v974 = vadd.f32 %v749, %v973
        %v975 = vpop.f32.mrf.mxu0
        %976 = vmatprep.mubr.f32.mxu0 0.0
        %977 = vmatmul.mubr.f32.gmra.mxu0 %v422
        %v978 = vpop.f32.mrf.mxu0
        %v979 = vadd.f32 %v754, %v978
        %v980 = vpop.f32.mrf.mxu0
        %981 = vmatprep.mubr.f32.mxu0 0.0
        %982 = vmatmul.mubr.f32.gmra.mxu0 %v423
        %v983 = vpop.f32.mrf.mxu0
        %v984 = vadd.f32 %v759, %v983
        %v985 = vpop.f32.mrf.mxu0
        %986 = vmatprep.mubr.f32.mxu0 0.0
        %987 = vmatmul.mubr.f32.gmra.mxu0 %v424
        %v988 = vpop.f32.mrf.mxu0
        %v989 = vadd.f32 %v764, %v988
        %v990 = vpop.f32.mrf.mxu0
        %991 = vmatprep.mubr.f32.mxu0 0.0
        %992 = vmatmul.mubr.f32.gmra.mxu0 %v425
        %v993 = vpop.f32.mrf.mxu0
        %v994 = vadd.f32 %v769, %v993
        %v995 = vpop.f32.mrf.mxu0
        %996 = vmatprep.mubr.f32.mxu0 0.0
        %997 = vmatmul.mubr.f32.gmra.mxu0 %v426
        %v998 = vpop.f32.mrf.mxu0
        %v999 = vadd.f32 %v774, %v998
        %v1000 = vpop.f32.mrf.mxu0
        %1001 = vmatprep.mubr.f32.mxu0 0.0
        %1002 = vmatmul.mubr.f32.gmra.mxu0 %v427
        %v1003 = vpop.f32.mrf.mxu0
        %v1004 = vadd.f32 %v779, %v1003
        %v1005 = vpop.f32.mrf.mxu0
        %1006 = vmatprep.mubr.f32.mxu0 0.0
        %1007 = vmatmul.mubr.f32.gmra.mxu0 %v428
        %v1008 = vpop.f32.mrf.mxu0
        %v1009 = vadd.f32 %v784, %v1008
        %v1010 = vpop.f32.mrf.mxu0
        %1011 = vmatprep.mubr.f32.mxu0 0.0
        %1012 = vmatmul.mubr.f32.gmra.mxu0 %v429
        %v1013 = vpop.f32.mrf.mxu0
        %v1014 = vadd.f32 %v789, %v1013
        %v1015 = vpop.f32.mrf.mxu0
        %1016 = vmatprep.mubr.f32.mxu0 0.0
        %1017 = vmatmul.mubr.f32.gmra.mxu0 %v430
        %v1018 = vpop.f32.mrf.mxu0
        %v1019 = vadd.f32 %v794, %v1018
        %v1020 = vpop.f32.mrf.mxu0
        %1021 = vmatprep.mubr.f32.mxu0 0.0
        %1022 = vmatmul.mubr.f32.gmra.mxu0 %v431
        %v1023 = vpop.f32.mrf.mxu0
        %v1024 = vadd.f32 %v799, %v1023
        %v1025 = vpop.f32.mrf.mxu0
        %1026 = vmatprep.mubr.f32.mxu0 0.0
        %1027 = vmatmul.mubr.f32.gmra.mxu0 %v432
        %v1028 = vpop.f32.mrf.mxu0
        %v1029 = vadd.f32 %v804, %v1028
        %v1030 = vpop.f32.mrf.mxu0
        %1031 = vmatprep.mubr.f32.mxu0 0.0
        %1032 = vmatmul.mubr.f32.gmra.mxu0 %v433
        %v1033 = vpop.f32.mrf.mxu0
        %v1034 = vadd.f32 %v809, %v1033
        %v1035 = vpop.f32.mrf.mxu0
        %1036 = vmatprep.mubr.f32.mxu0 0.0
        %1037 = vmatmul.mubr.f32.gmra.mxu0 %v434
        %v1038 = vpop.f32.mrf.mxu0
        %v1039 = vadd.f32 %v814, %v1038
        %v1040 = vpop.f32.mrf.mxu0
        %1041 = vmatprep.mubr.f32.mxu0 0.0
        %1042 = vmatmul.mubr.f32.gmra.mxu0 %v435
        %v1043 = vpop.f32.mrf.mxu0
        %v1044 = vadd.f32 %v819, %v1043
        %v1045 = vpop.f32.mrf.mxu0
        %1046 = vmatprep.mubr.f32.mxu0 0.0
        %1047 = vmatmul.mubr.f32.gmra.mxu0 %v436
        %v1048 = vpop.f32.mrf.mxu0
        %v1049 = vadd.f32 %v824, %v1048
        %v1050 = vpop.f32.mrf.mxu0
        %1051 = vmatprep.mubr.f32.mxu0 0.0
        %1052 = vmatmul.mubr.f32.gmra.mxu0 %v437
        %v1053 = vpop.f32.mrf.mxu0
        %v1054 = vadd.f32 %v829, %v1053
        %v1055 = vpop.f32.mrf.mxu0
        %1056 = vmatprep.mubr.f32.mxu0 0.0
        %1057 = vmatmul.mubr.f32.gmra.mxu0 %v438
        %v1058 = vpop.f32.mrf.mxu0
        %v1059 = vadd.f32 %v834, %v1058
        %v1060 = vpop.f32.mrf.mxu0
        %1061 = vmatprep.mubr.f32.mxu0 0.0
        %1062 = vmatmul.mubr.f32.gmra.mxu0 %v439
        %v1063 = vpop.f32.mrf.mxu0
        %v1064 = vadd.f32 %v839, %v1063
        %v1065 = vpop.f32.mrf.mxu0
        %1066 = vmatprep.mubr.f32.mxu0 0.0
        %1067 = vmatmul.mubr.f32.gmra.mxu0 %v440
        %v1068 = vpop.f32.mrf.mxu0
        %v1069 = vadd.f32 %v844, %v1068
        %v1070 = vpop.f32.mrf.mxu0
        %1071 = vmatprep.mubr.f32.mxu0 0.0
        %1072 = vmatmul.mubr.f32.gmra.mxu0 %v441
        %v1073 = vpop.f32.mrf.mxu0
        %v1074 = vadd.f32 %v849, %v1073
        %v1075 = vpop.f32.mrf.mxu0
        %1076 = vmatprep.mubr.f32.mxu0 0.0
        %1077 = vmatmul.mubr.f32.gmra.mxu0 %v442
        %v1078 = vpop.f32.mrf.mxu0
        %v1079 = vadd.f32 %v854, %v1078
        %v1080 = vpop.f32.mrf.mxu0
        %1081 = vmatprep.mubr.f32.mxu0 0.0
        %1082 = vmatmul.mubr.f32.gmra.mxu0 %v443
        %v1083 = vpop.f32.mrf.mxu0
        %v1084 = vadd.f32 %v859, %v1083
        %v1085 = vpop.f32.mrf.mxu0
        %1086 = vmatprep.mubr.f32.mxu0 0.0
        %1087 = vmatmul.mubr.f32.gmra.mxu0 %v444
        %v1088 = vpop.f32.mrf.mxu0
        %v1089 = vadd.f32 %v864, %v1088
        %v1090 = vpop.f32.mrf.mxu0
        %1091 = vmatprep.mubr.f32.mxu0 0.0
        %1092 = vmatmul.mubr.f32.gmra.mxu0 %v445
        %v1093 = vpop.f32.mrf.mxu0
        %v1094 = vadd.f32 %v869, %v1093
        %v1095 = vpop.f32.mrf.mxu0
        %1096 = vmatprep.mubr.f32.mxu0 0.0
        %1097 = vmatmul.mubr.f32.gmra.mxu0 %v446
        %v1098 = vpop.f32.mrf.mxu0
        %v1099 = vadd.f32 %v874, %v1098
        %v1100 = vpop.f32.mrf.mxu0
        %1101 = vmatprep.mubr.f32.mxu0 0.0
        %1102 = vmatmul.mubr.f32.gmra.mxu0 %v447
        %v1103 = vpop.f32.mrf.mxu0
        %v1104 = vadd.f32 %v879, %v1103
        %v1105 = vpop.f32.mrf.mxu0
        %1106 = vmatprep.mubr.f32.mxu0 0.0
        %1107 = vmatmul.mubr.f32.gmra.mxu0 %v448
        %v1108 = vpop.f32.mrf.mxu0
        %v1109 = vadd.f32 %v884, %v1108
        %v1110 = vpop.f32.mrf.mxu0
        %1111 = vmatprep.mubr.f32.mxu0 0.0
        %1112 = vmatmul.mubr.f32.gmra.mxu0 %v449
        %v1113 = vpop.f32.mrf.mxu0
        %v1114 = vadd.f32 %v889, %v1113
        %v1115 = vpop.f32.mrf.mxu0
        %1116 = vmatprep.mubr.f32.mxu0 0.0
        %1117 = vmatmul.mubr.f32.gmra.mxu0 %v450
        %v1118 = vpop.f32.mrf.mxu0
        %v1119 = vadd.f32 %v894, %v1118
        %v1120 = vpop.f32.mrf.mxu0
        %1121 = vmatprep.mubr.f32.mxu0 0.0
        %1122 = vmatmul.mubr.f32.gmra.mxu0 %v451
        %v1123 = vpop.f32.mrf.mxu0
        %v1124 = vadd.f32 %v899, %v1123
        %v1125 = vpop.f32.mrf.mxu0
        %1126 = vdwg.mxu0
        %v1127 = vld [vmem:[%s2] sm:$0x1]
        %v1129 = vlaneseq
        %v1130 = vshrl.u32 %v1129, 7
        %v1131 = vsub.s32 0, %v1130
        %v1132 = vrot.slane %v1127, %v1131
        %v1134 = vadd.f32 %v969, %v1132
        %v1135 = vadd.f32 %v974, %v1132
        %v1136 = vadd.f32 %v979, %v1132
        %v1137 = vadd.f32 %v984, %v1132
        %v1138 = vadd.f32 %v989, %v1132
        %v1139 = vadd.f32 %v994, %v1132
        %v1140 = vadd.f32 %v999, %v1132
        %v1141 = vadd.f32 %v1004, %v1132
        %v1142 = vadd.f32 %v1009, %v1132
        %v1143 = vadd.f32 %v1014, %v1132
        %v1144 = vadd.f32 %v1019, %v1132
        %v1145 = vadd.f32 %v1024, %v1132
        %v1146 = vadd.f32 %v1029, %v1132
        %v1147 = vadd.f32 %v1034, %v1132
        %v1148 = vadd.f32 %v1039, %v1132
        %v1149 = vadd.f32 %v1044, %v1132
        %v1150 = vadd.f32 %v1049, %v1132
        %v1151 = vadd.f32 %v1054, %v1132
        %v1152 = vadd.f32 %v1059, %v1132
        %v1153 = vadd.f32 %v1064, %v1132
        %v1154 = vadd.f32 %v1069, %v1132
        %v1155 = vadd.f32 %v1074, %v1132
        %v1156 = vadd.f32 %v1079, %v1132
        %v1157 = vadd.f32 %v1084, %v1132
        %v1158 = vadd.f32 %v1089, %v1132
        %v1159 = vadd.f32 %v1094, %v1132
        %v1160 = vadd.f32 %v1099, %v1132
        %v1161 = vadd.f32 %v1104, %v1132
        %v1162 = vadd.f32 %v1109, %v1132
        %v1163 = vadd.f32 %v1114, %v1132
        %v1164 = vadd.f32 %v1119, %v1132
        %v1165 = vadd.f32 %v1124, %v1132
        %v1166 = vmax.f32 %v1134, 0.0
        %v1167 = vmax.f32 %v1135, 0.0
        %v1168 = vmax.f32 %v1136, 0.0
        %v1169 = vmax.f32 %v1137, 0.0
        %v1170 = vmax.f32 %v1138, 0.0
        %v1171 = vmax.f32 %v1139, 0.0
        %v1172 = vmax.f32 %v1140, 0.0
        %v1173 = vmax.f32 %v1141, 0.0
        %v1174 = vmax.f32 %v1142, 0.0
        %v1175 = vmax.f32 %v1143, 0.0
        %v1176 = vmax.f32 %v1144, 0.0
        %v1177 = vmax.f32 %v1145, 0.0
        %v1178 = vmax.f32 %v1146, 0.0
        %v1179 = vmax.f32 %v1147, 0.0
        %v1180 = vmax.f32 %v1148, 0.0
        %v1181 = vmax.f32 %v1149, 0.0
        %v1182 = vmax.f32 %v1150, 0.0
        %v1183 = vmax.f32 %v1151, 0.0
        %v1184 = vmax.f32 %v1152, 0.0
        %v1185 = vmax.f32 %v1153, 0.0
        %v1186 = vmax.f32 %v1154, 0.0
        %v1187 = vmax.f32 %v1155, 0.0
        %v1188 = vmax.f32 %v1156, 0.0
        %v1189 = vmax.f32 %v1157, 0.0
        %v1190 = vmax.f32 %v1158, 0.0
        %v1191 = vmax.f32 %v1159, 0.0
        %v1192 = vmax.f32 %v1160, 0.0
        %v1193 = vmax.f32 %v1161, 0.0
        %v1194 = vmax.f32 %v1162, 0.0
        %v1195 = vmax.f32 %v1163, 0.0
        %v1196 = vmax.f32 %v1164, 0.0
        %v1197 = vmax.f32 %v1165, 0.0
        %v1198 = vld [vmem:[%s3] sm:$0xff]
        %v1199 = vld [vmem:[%s3 + $0x8] sm:$0xff]
        %v1200 = vld [vmem:[%s3 + $0x10] sm:$0xff]
        %v1201 = vld [vmem:[%s3 + $0x18] sm:$0xff]
        %v1202 = vld [vmem:[%s3 + $0x20] sm:$0xff]
        %v1203 = vld [vmem:[%s3 + $0x28] sm:$0xff]
        %v1204 = vld [vmem:[%s3 + $0x30] sm:$0xff]
        %v1205 = vld [vmem:[%s3 + $0x38] sm:$0xff]
        %v1206 = vld [vmem:[%s3 + $0x40] sm:$0xff]
        %v1207 = vld [vmem:[%s3 + $0x48] sm:$0xff]
        %v1208 = vld [vmem:[%s3 + $0x50] sm:$0xff]
        %v1209 = vld [vmem:[%s3 + $0x58] sm:$0xff]
        %v1210 = vld [vmem:[%s3 + $0x60] sm:$0xff]
        %v1211 = vld [vmem:[%s3 + $0x68] sm:$0xff]
        %v1212 = vld [vmem:[%s3 + $0x70] sm:$0xff]
        %v1213 = vld [vmem:[%s3 + $0x78] sm:$0xff]
        %v1214 = vld [vmem:[%s4] sm:$0x1]
        %v1216 = vlaneseq
        %v1217 = vshrl.u32 %v1216, 7
        %v1218 = vsub.s32 0, %v1217
        %v1219 = vrot.slane %v1214, %v1218
        %1221 = vmatprep.subr.mxu0 0.0
        %1222 = vmatpush1.msra.mxu0 %v1213
        %1223 = vmatprep.subr.mxu0 0.0
        %1224 = vmatpush1.msra.mxu0 %v1212
        %1225 = vmatprep.subr.mxu0 0.0
        %1226 = vmatpush1.msra.mxu0 %v1211
        %1227 = vmatprep.subr.mxu0 0.0
        %1228 = vmatpush1.msra.mxu0 %v1210
        %1229 = vmatprep.subr.mxu0 0.0
        %1230 = vmatpush1.msra.mxu0 %v1209
        %1231 = vmatprep.subr.mxu0 0.0
        %1232 = vmatpush1.msra.mxu0 %v1208
        %1233 = vmatprep.subr.mxu0 0.0
        %1234 = vmatpush1.msra.mxu0 %v1207
        %1235 = vmatprep.subr.mxu0 0.0
        %1236 = vmatpush1.msra.mxu0 %v1206
        %1237 = vmatprep.subr.mxu0 0.0
        %1238 = vmatpush1.msra.mxu0 %v1205
        %1239 = vmatprep.subr.mxu0 0.0
        %1240 = vmatpush1.msra.mxu0 %v1204
        %1241 = vmatprep.subr.mxu0 0.0
        %1242 = vmatpush1.msra.mxu0 %v1203
        %1243 = vmatprep.subr.mxu0 0.0
        %1244 = vmatpush1.msra.mxu0 %v1202
        %1245 = vmatprep.subr.mxu0 0.0
        %1246 = vmatpush1.msra.mxu0 %v1201
        %1247 = vmatprep.subr.mxu0 0.0
        %1248 = vmatpush1.msra.mxu0 %v1200
        %1249 = vmatprep.subr.mxu0 0.0
        %1250 = vmatpush1.msra.mxu0 %v1199
        %1251 = vmatprep.subr.mxu0 0.0
        %1252 = vmatpush1.msra.mxu0 %v1198
        %1253 = vmatprep.subr.mxu0 0.0
        %1254 = vmatpush2.msra.mxu0 0.0
        %1255 = vmatprep.subr.mxu0 0.0
        %1256 = vmatpush2.msra.mxu0 0.0
        %1257 = vmatprep.subr.mxu0 0.0
        %1258 = vmatpush2.msra.mxu0 0.0
        %1259 = vmatprep.subr.mxu0 0.0
        %1260 = vmatpush2.msra.mxu0 0.0
        %1261 = vmatprep.subr.mxu0 0.0
        %1262 = vmatpush2.msra.mxu0 0.0
        %1263 = vmatprep.subr.mxu0 0.0
        %1264 = vmatpush2.msra.mxu0 0.0
        %1265 = vmatprep.subr.mxu0 0.0
        %1266 = vmatpush2.msra.mxu0 0.0
        %1267 = vmatprep.subr.mxu0 0.0
        %1268 = vmatpush2.msra.mxu0 0.0
        %1269 = vmatprep.subr.mxu0 0.0
        %1270 = vmatpush2.msra.mxu0 0.0
        %1271 = vmatprep.subr.mxu0 0.0
        %1272 = vmatpush2.msra.mxu0 0.0
        %1273 = vmatprep.subr.mxu0 0.0
        %1274 = vmatpush2.msra.mxu0 0.0
        %1275 = vmatprep.subr.mxu0 0.0
        %1276 = vmatpush2.msra.mxu0 0.0
        %1277 = vmatprep.subr.mxu0 0.0
        %1278 = vmatpush2.msra.mxu0 0.0
        %1279 = vmatprep.subr.mxu0 0.0
        %1280 = vmatpush2.msra.mxu0 0.0
        %1281 = vmatprep.subr.mxu0 0.0
        %1282 = vmatpush2.msra.mxu0 0.0
        %1283 = vmatprep.subr.mxu0 0.0
        %1284 = vmatpush2.msra.mxu0 0.0
        %1285 = vmatprep.mubr.f32.mxu0 0.0
        %1286 = vmatmul.mubr.f32.gmra.mxu0 %v1166
        %v1287 = vpop.f32.mrf.mxu0
        %v1288 = vadd.f32 %v1219, %v1287
        %v1289 = vpop.f32.mrf.mxu0
        %1290 = vmatprep.mubr.f32.mxu0 0.0
        %1291 = vmatmul.mubr.f32.gmra.mxu0 %v1167
        %v1292 = vpop.f32.mrf.mxu0
        %v1293 = vadd.f32 %v1219, %v1292
        %v1294 = vpop.f32.mrf.mxu0
        %1295 = vmatprep.mubr.f32.mxu0 0.0
        %1296 = vmatmul.mubr.f32.gmra.mxu0 %v1168
        %v1297 = vpop.f32.mrf.mxu0
        %v1298 = vadd.f32 %v1219, %v1297
        %v1299 = vpop.f32.mrf.mxu0
        %1300 = vmatprep.mubr.f32.mxu0 0.0
        %1301 = vmatmul.mubr.f32.gmra.mxu0 %v1169
        %v1302 = vpop.f32.mrf.mxu0
        %v1303 = vadd.f32 %v1219, %v1302
        %v1304 = vpop.f32.mrf.mxu0
        %1305 = vmatprep.mubr.f32.mxu0 0.0
        %1306 = vmatmul.mubr.f32.gmra.mxu0 %v1170
        %v1307 = vpop.f32.mrf.mxu0
        %v1308 = vadd.f32 %v1219, %v1307
        %v1309 = vpop.f32.mrf.mxu0
        %1310 = vmatprep.mubr.f32.mxu0 0.0
        %1311 = vmatmul.mubr.f32.gmra.mxu0 %v1171
        %v1312 = vpop.f32.mrf.mxu0
        %v1313 = vadd.f32 %v1219, %v1312
        %v1314 = vpop.f32.mrf.mxu0
        %1315 = vmatprep.mubr.f32.mxu0 0.0
        %1316 = vmatmul.mubr.f32.gmra.mxu0 %v1172
        %v1317 = vpop.f32.mrf.mxu0
        %v1318 = vadd.f32 %v1219, %v1317
        %v1319 = vpop.f32.mrf.mxu0
        %1320 = vmatprep.mubr.f32.mxu0 0.0
        %1321 = vmatmul.mubr.f32.gmra.mxu0 %v1173
        %v1322 = vpop.f32.mrf.mxu0
        %v1323 = vadd.f32 %v1219, %v1322
        %v1324 = vpop.f32.mrf.mxu0
        %1325 = vmatprep.mubr.f32.mxu0 0.0
        %1326 = vmatmul.mubr.f32.gmra.mxu0 %v1174
        %v1327 = vpop.f32.mrf.mxu0
        %v1328 = vadd.f32 %v1219, %v1327
        %v1329 = vpop.f32.mrf.mxu0
        %1330 = vmatprep.mubr.f32.mxu0 0.0
        %1331 = vmatmul.mubr.f32.gmra.mxu0 %v1175
        %v1332 = vpop.f32.mrf.mxu0
        %v1333 = vadd.f32 %v1219, %v1332
        %v1334 = vpop.f32.mrf.mxu0
        %1335 = vmatprep.mubr.f32.mxu0 0.0
        %1336 = vmatmul.mubr.f32.gmra.mxu0 %v1176
        %v1337 = vpop.f32.mrf.mxu0
        %v1338 = vadd.f32 %v1219, %v1337
        %v1339 = vpop.f32.mrf.mxu0
        %1340 = vmatprep.mubr.f32.mxu0 0.0
        %1341 = vmatmul.mubr.f32.gmra.mxu0 %v1177
        %v1342 = vpop.f32.mrf.mxu0
        %v1343 = vadd.f32 %v1219, %v1342
        %v1344 = vpop.f32.mrf.mxu0
        %1345 = vmatprep.mubr.f32.mxu0 0.0
        %1346 = vmatmul.mubr.f32.gmra.mxu0 %v1178
        %v1347 = vpop.f32.mrf.mxu0
        %v1348 = vadd.f32 %v1219, %v1347
        %v1349 = vpop.f32.mrf.mxu0
        %1350 = vmatprep.mubr.f32.mxu0 0.0
        %1351 = vmatmul.mubr.f32.gmra.mxu0 %v1179
        %v1352 = vpop.f32.mrf.mxu0
        %v1353 = vadd.f32 %v1219, %v1352
        %v1354 = vpop.f32.mrf.mxu0
        %1355 = vmatprep.mubr.f32.mxu0 0.0
        %1356 = vmatmul.mubr.f32.gmra.mxu0 %v1180
        %v1357 = vpop.f32.mrf.mxu0
        %v1358 = vadd.f32 %v1219, %v1357
        %v1359 = vpop.f32.mrf.mxu0
        %1360 = vmatprep.mubr.f32.mxu0 0.0
        %1361 = vmatmul.mubr.f32.gmra.mxu0 %v1181
        %v1362 = vpop.f32.mrf.mxu0
        %v1363 = vadd.f32 %v1219, %v1362
        %v1364 = vpop.f32.mrf.mxu0
        %1365 = vmatprep.mubr.f32.mxu0 0.0
        %1366 = vmatmul.mubr.f32.gmra.mxu0 %v1182
        %v1367 = vpop.f32.mrf.mxu0
        %v1368 = vadd.f32 %v1219, %v1367
        %v1369 = vpop.f32.mrf.mxu0
        %1370 = vmatprep.mubr.f32.mxu0 0.0
        %1371 = vmatmul.mubr.f32.gmra.mxu0 %v1183
        %v1372 = vpop.f32.mrf.mxu0
        %v1373 = vadd.f32 %v1219, %v1372
        %v1374 = vpop.f32.mrf.mxu0
        %1375 = vmatprep.mubr.f32.mxu0 0.0
        %1376 = vmatmul.mubr.f32.gmra.mxu0 %v1184
        %v1377 = vpop.f32.mrf.mxu0
        %v1378 = vadd.f32 %v1219, %v1377
        %v1379 = vpop.f32.mrf.mxu0
        %1380 = vmatprep.mubr.f32.mxu0 0.0
        %1381 = vmatmul.mubr.f32.gmra.mxu0 %v1185
        %v1382 = vpop.f32.mrf.mxu0
        %v1383 = vadd.f32 %v1219, %v1382
        %v1384 = vpop.f32.mrf.mxu0
        %1385 = vmatprep.mubr.f32.mxu0 0.0
        %1386 = vmatmul.mubr.f32.gmra.mxu0 %v1186
        %v1387 = vpop.f32.mrf.mxu0
        %v1388 = vadd.f32 %v1219, %v1387
        %v1389 = vpop.f32.mrf.mxu0
        %1390 = vmatprep.mubr.f32.mxu0 0.0
        %1391 = vmatmul.mubr.f32.gmra.mxu0 %v1187
        %v1392 = vpop.f32.mrf.mxu0
        %v1393 = vadd.f32 %v1219, %v1392
        %v1394 = vpop.f32.mrf.mxu0
        %1395 = vmatprep.mubr.f32.mxu0 0.0
        %1396 = vmatmul.mubr.f32.gmra.mxu0 %v1188
        %v1397 = vpop.f32.mrf.mxu0
        %v1398 = vadd.f32 %v1219, %v1397
        %v1399 = vpop.f32.mrf.mxu0
        %1400 = vmatprep.mubr.f32.mxu0 0.0
        %1401 = vmatmul.mubr.f32.gmra.mxu0 %v1189
        %v1402 = vpop.f32.mrf.mxu0
        %v1403 = vadd.f32 %v1219, %v1402
        %v1404 = vpop.f32.mrf.mxu0
        %1405 = vmatprep.mubr.f32.mxu0 0.0
        %1406 = vmatmul.mubr.f32.gmra.mxu0 %v1190
        %v1407 = vpop.f32.mrf.mxu0
        %v1408 = vadd.f32 %v1219, %v1407
        %v1409 = vpop.f32.mrf.mxu0
        %1410 = vmatprep.mubr.f32.mxu0 0.0
        %1411 = vmatmul.mubr.f32.gmra.mxu0 %v1191
        %v1412 = vpop.f32.mrf.mxu0
        %v1413 = vadd.f32 %v1219, %v1412
        %v1414 = vpop.f32.mrf.mxu0
        %1415 = vmatprep.mubr.f32.mxu0 0.0
        %1416 = vmatmul.mubr.f32.gmra.mxu0 %v1192
        %v1417 = vpop.f32.mrf.mxu0
        %v1418 = vadd.f32 %v1219, %v1417
        %v1419 = vpop.f32.mrf.mxu0
        %1420 = vmatprep.mubr.f32.mxu0 0.0
        %1421 = vmatmul.mubr.f32.gmra.mxu0 %v1193
        %v1422 = vpop.f32.mrf.mxu0
        %v1423 = vadd.f32 %v1219, %v1422
        %v1424 = vpop.f32.mrf.mxu0
        %1425 = vmatprep.mubr.f32.mxu0 0.0
        %1426 = vmatmul.mubr.f32.gmra.mxu0 %v1194
        %v1427 = vpop.f32.mrf.mxu0
        %v1428 = vadd.f32 %v1219, %v1427
        %v1429 = vpop.f32.mrf.mxu0
        %1430 = vmatprep.mubr.f32.mxu0 0.0
        %1431 = vmatmul.mubr.f32.gmra.mxu0 %v1195
        %v1432 = vpop.f32.mrf.mxu0
        %v1433 = vadd.f32 %v1219, %v1432
        %v1434 = vpop.f32.mrf.mxu0
        %1435 = vmatprep.mubr.f32.mxu0 0.0
        %1436 = vmatmul.mubr.f32.gmra.mxu0 %v1196
        %v1437 = vpop.f32.mrf.mxu0
        %v1438 = vadd.f32 %v1219, %v1437
        %v1439 = vpop.f32.mrf.mxu0
        %1440 = vmatprep.mubr.f32.mxu0 0.0
        %1441 = vmatmul.mubr.f32.gmra.mxu0 %v1197
        %v1442 = vpop.f32.mrf.mxu0
        %v1443 = vadd.f32 %v1219, %v1442
        %v1444 = vpop.f32.mrf.mxu0
        %1445 = vdwg.mxu0
        %1446 = vmax.xlane.f32.xlu0 %v1288
        %v1447 = vpop.xlane.xlu0 %1446
        %1448 = vmax.xlane.f32.xlu0 %v1293
        %v1449 = vpop.xlane.xlu0 %1448
        %1450 = vmax.xlane.f32.xlu0 %v1298
        %v1451 = vpop.xlane.xlu0 %1450
        %1452 = vmax.xlane.f32.xlu0 %v1303
        %v1453 = vpop.xlane.xlu0 %1452
        %1454 = vmax.xlane.f32.xlu0 %v1308
        %v1455 = vpop.xlane.xlu0 %1454
        %1456 = vmax.xlane.f32.xlu0 %v1313
        %v1457 = vpop.xlane.xlu0 %1456
        %1458 = vmax.xlane.f32.xlu0 %v1318
        %v1459 = vpop.xlane.xlu0 %1458
        %1460 = vmax.xlane.f32.xlu0 %v1323
        %v1461 = vpop.xlane.xlu0 %1460
        %1462 = vmax.xlane.f32.xlu0 %v1328
        %v1463 = vpop.xlane.xlu0 %1462
        %1464 = vmax.xlane.f32.xlu0 %v1333
        %v1465 = vpop.xlane.xlu0 %1464
        %1466 = vmax.xlane.f32.xlu0 %v1338
        %v1467 = vpop.xlane.xlu0 %1466
        %1468 = vmax.xlane.f32.xlu0 %v1343
        %v1469 = vpop.xlane.xlu0 %1468
        %1470 = vmax.xlane.f32.xlu0 %v1348
        %v1471 = vpop.xlane.xlu0 %1470
        %1472 = vmax.xlane.f32.xlu0 %v1353
        %v1473 = vpop.xlane.xlu0 %1472
        %1474 = vmax.xlane.f32.xlu0 %v1358
        %v1475 = vpop.xlane.xlu0 %1474
        %1476 = vmax.xlane.f32.xlu0 %v1363
        %v1477 = vpop.xlane.xlu0 %1476
        %1478 = vmax.xlane.f32.xlu0 %v1368
        %v1479 = vpop.xlane.xlu0 %1478
        %1480 = vmax.xlane.f32.xlu0 %v1373
        %v1481 = vpop.xlane.xlu0 %1480
        %1482 = vmax.xlane.f32.xlu0 %v1378
        %v1483 = vpop.xlane.xlu0 %1482
        %1484 = vmax.xlane.f32.xlu0 %v1383
        %v1485 = vpop.xlane.xlu0 %1484
        %1486 = vmax.xlane.f32.xlu0 %v1388
        %v1487 = vpop.xlane.xlu0 %1486
        %1488 = vmax.xlane.f32.xlu0 %v1393
        %v1489 = vpop.xlane.xlu0 %1488
        %1490 = vmax.xlane.f32.xlu0 %v1398
        %v1491 = vpop.xlane.xlu0 %1490
        %1492 = vmax.xlane.f32.xlu0 %v1403
        %v1493 = vpop.xlane.xlu0 %1492
        %1494 = vmax.xlane.f32.xlu0 %v1408
        %v1495 = vpop.xlane.xlu0 %1494
        %1496 = vmax.xlane.f32.xlu0 %v1413
        %v1497 = vpop.xlane.xlu0 %1496
        %1498 = vmax.xlane.f32.xlu0 %v1418
        %v1499 = vpop.xlane.xlu0 %1498
        %1500 = vmax.xlane.f32.xlu0 %v1423
        %v1501 = vpop.xlane.xlu0 %1500
        %1502 = vmax.xlane.f32.xlu0 %v1428
        %v1503 = vpop.xlane.xlu0 %1502
        %1504 = vmax.xlane.f32.xlu0 %v1433
        %v1505 = vpop.xlane.xlu0 %1504
        %1506 = vmax.xlane.f32.xlu0 %v1438
        %v1507 = vpop.xlane.xlu0 %1506
        %1508 = vmax.xlane.f32.xlu0 %v1443
        %v1509 = vpop.xlane.xlu0 %1508
        %v1510 = vsub.f32 %v1288, %v1447
        %v1511 = vsub.f32 %v1293, %v1449
        %v1512 = vsub.f32 %v1298, %v1451
        %v1513 = vsub.f32 %v1303, %v1453
        %v1514 = vsub.f32 %v1308, %v1455
        %v1515 = vsub.f32 %v1313, %v1457
        %v1516 = vsub.f32 %v1318, %v1459
        %v1517 = vsub.f32 %v1323, %v1461
        %v1518 = vsub.f32 %v1328, %v1463
        %v1519 = vsub.f32 %v1333, %v1465
        %v1520 = vsub.f32 %v1338, %v1467
        %v1521 = vsub.f32 %v1343, %v1469
        %v1522 = vsub.f32 %v1348, %v1471
        %v1523 = vsub.f32 %v1353, %v1473
        %v1524 = vsub.f32 %v1358, %v1475
        %v1525 = vsub.f32 %v1363, %v1477
        %v1526 = vsub.f32 %v1368, %v1479
        %v1527 = vsub.f32 %v1373, %v1481
        %v1528 = vsub.f32 %v1378, %v1483
        %v1529 = vsub.f32 %v1383, %v1485
        %v1530 = vsub.f32 %v1388, %v1487
        %v1531 = vsub.f32 %v1393, %v1489
        %v1532 = vsub.f32 %v1398, %v1491
        %v1533 = vsub.f32 %v1403, %v1493
        %v1534 = vsub.f32 %v1408, %v1495
        %v1535 = vsub.f32 %v1413, %v1497
        %v1536 = vsub.f32 %v1418, %v1499
        %v1537 = vsub.f32 %v1423, %v1501
        %v1538 = vsub.f32 %v1428, %v1503
        %v1539 = vsub.f32 %v1433, %v1505
        %v1540 = vsub.f32 %v1438, %v1507
        %v1541 = vsub.f32 %v1443, %v1509
        %v1542 = vmul.f32 %v1510, 1.442695
        %v1543 = vpow.pop %v1542
        %v1544 = vmul.f32 %v1511, 1.442695
        %v1545 = vpow.pop %v1544
        %v1546 = vmul.f32 %v1512, 1.442695
        %v1547 = vpow.pop %v1546
        %v1548 = vmul.f32 %v1513, 1.442695
        %v1549 = vpow.pop %v1548
        %v1550 = vmul.f32 %v1514, 1.442695
        %v1551 = vpow.pop %v1550
        %v1552 = vmul.f32 %v1515, 1.442695
        %v1553 = vpow.pop %v1552
        %v1554 = vmul.f32 %v1516, 1.442695
        %v1555 = vpow.pop %v1554
        %v1556 = vmul.f32 %v1517, 1.442695
        %v1557 = vpow.pop %v1556
        %v1558 = vmul.f32 %v1518, 1.442695
        %v1559 = vpow.pop %v1558
        %v1560 = vmul.f32 %v1519, 1.442695
        %v1561 = vpow.pop %v1560
        %v1562 = vmul.f32 %v1520, 1.442695
        %v1563 = vpow.pop %v1562
        %v1564 = vmul.f32 %v1521, 1.442695
        %v1565 = vpow.pop %v1564
        %v1566 = vmul.f32 %v1522, 1.442695
        %v1567 = vpow.pop %v1566
        %v1568 = vmul.f32 %v1523, 1.442695
        %v1569 = vpow.pop %v1568
        %v1570 = vmul.f32 %v1524, 1.442695
        %v1571 = vpow.pop %v1570
        %v1572 = vmul.f32 %v1525, 1.442695
        %v1573 = vpow.pop %v1572
        %v1574 = vmul.f32 %v1526, 1.442695
        %v1575 = vpow.pop %v1574
        %v1576 = vmul.f32 %v1527, 1.442695
        %v1577 = vpow.pop %v1576
        %v1578 = vmul.f32 %v1528, 1.442695
        %v1579 = vpow.pop %v1578
        %v1580 = vmul.f32 %v1529, 1.442695
        %v1581 = vpow.pop %v1580
        %v1582 = vmul.f32 %v1530, 1.442695
        %v1583 = vpow.pop %v1582
        %v1584 = vmul.f32 %v1531, 1.442695
        %v1585 = vpow.pop %v1584
        %v1586 = vmul.f32 %v1532, 1.442695
        %v1587 = vpow.pop %v1586
        %v1588 = vmul.f32 %v1533, 1.442695
        %v1589 = vpow.pop %v1588
        %v1590 = vmul.f32 %v1534, 1.442695
        %v1591 = vpow.pop %v1590
        %v1592 = vmul.f32 %v1535, 1.442695
        %v1593 = vpow.pop %v1592
        %v1594 = vmul.f32 %v1536, 1.442695
        %v1595 = vpow.pop %v1594
        %v1596 = vmul.f32 %v1537, 1.442695
        %v1597 = vpow.pop %v1596
        %v1598 = vmul.f32 %v1538, 1.442695
        %v1599 = vpow.pop %v1598
        %v1600 = vmul.f32 %v1539, 1.442695
        %v1601 = vpow.pop %v1600
        %v1602 = vmul.f32 %v1540, 1.442695
        %v1603 = vpow.pop %v1602
        %v1604 = vmul.f32 %v1541, 1.442695
        %v1605 = vpow.pop %v1604
        %1606 = vadd.xlane.f32.xlu0 %v1543
        %v1607 = vpop.xlane.xlu0 %1606
        %1608 = vadd.xlane.f32.xlu0 %v1545
        %v1609 = vpop.xlane.xlu0 %1608
        %1610 = vadd.xlane.f32.xlu0 %v1547
        %v1611 = vpop.xlane.xlu0 %1610
        %1612 = vadd.xlane.f32.xlu0 %v1549
        %v1613 = vpop.xlane.xlu0 %1612
        %1614 = vadd.xlane.f32.xlu0 %v1551
        %v1615 = vpop.xlane.xlu0 %1614
        %1616 = vadd.xlane.f32.xlu0 %v1553
        %v1617 = vpop.xlane.xlu0 %1616
        %1618 = vadd.xlane.f32.xlu0 %v1555
        %v1619 = vpop.xlane.xlu0 %1618
        %1620 = vadd.xlane.f32.xlu0 %v1557
        %v1621 = vpop.xlane.xlu0 %1620
        %1622 = vadd.xlane.f32.xlu0 %v1559
        %v1623 = vpop.xlane.xlu0 %1622
        %1624 = vadd.xlane.f32.xlu0 %v1561
        %v1625 = vpop.xlane.xlu0 %1624
        %1626 = vadd.xlane.f32.xlu0 %v1563
        %v1627 = vpop.xlane.xlu0 %1626
        %1628 = vadd.xlane.f32.xlu0 %v1565
        %v1629 = vpop.xlane.xlu0 %1628
        %1630 = vadd.xlane.f32.xlu0 %v1567
        %v1631 = vpop.xlane.xlu0 %1630
        %1632 = vadd.xlane.f32.xlu0 %v1569
        %v1633 = vpop.xlane.xlu0 %1632
        %1634 = vadd.xlane.f32.xlu0 %v1571
        %v1635 = vpop.xlane.xlu0 %1634
        %1636 = vadd.xlane.f32.xlu0 %v1573
        %v1637 = vpop.xlane.xlu0 %1636
        %1638 = vadd.xlane.f32.xlu0 %v1575
        %v1639 = vpop.xlane.xlu0 %1638
        %1640 = vadd.xlane.f32.xlu0 %v1577
        %v1641 = vpop.xlane.xlu0 %1640
        %1642 = vadd.xlane.f32.xlu0 %v1579
        %v1643 = vpop.xlane.xlu0 %1642
        %1644 = vadd.xlane.f32.xlu0 %v1581
        %v1645 = vpop.xlane.xlu0 %1644
        %1646 = vadd.xlane.f32.xlu0 %v1583
        %v1647 = vpop.xlane.xlu0 %1646
        %1648 = vadd.xlane.f32.xlu0 %v1585
        %v1649 = vpop.xlane.xlu0 %1648
        %1650 = vadd.xlane.f32.xlu0 %v1587
        %v1651 = vpop.xlane.xlu0 %1650
        %1652 = vadd.xlane.f32.xlu0 %v1589
        %v1653 = vpop.xlane.xlu0 %1652
        %1654 = vadd.xlane.f32.xlu0 %v1591
        %v1655 = vpop.xlane.xlu0 %1654
        %1656 = vadd.xlane.f32.xlu0 %v1593
        %v1657 = vpop.xlane.xlu0 %1656
        %1658 = vadd.xlane.f32.xlu0 %v1595
        %v1659 = vpop.xlane.xlu0 %1658
        %1660 = vadd.xlane.f32.xlu0 %v1597
        %v1661 = vpop.xlane.xlu0 %1660
        %1662 = vadd.xlane.f32.xlu0 %v1599
        %v1663 = vpop.xlane.xlu0 %1662
        %1664 = vadd.xlane.f32.xlu0 %v1601
        %v1665 = vpop.xlane.xlu0 %1664
        %1666 = vadd.xlane.f32.xlu0 %v1603
        %v1667 = vpop.xlane.xlu0 %1666
        %1668 = vadd.xlane.f32.xlu0 %v1605
        %v1669 = vpop.xlane.xlu0 %1668
        %v1670 = vlog2.pop %v1607
        %v1671 = vmul.f32 %v1670, 0.6931472
        %v1672 = vlog2.pop %v1609
        %v1673 = vmul.f32 %v1672, 0.6931472
        %v1674 = vlog2.pop %v1611
        %v1675 = vmul.f32 %v1674, 0.6931472
        %v1676 = vlog2.pop %v1613
        %v1677 = vmul.f32 %v1676, 0.6931472
        %v1678 = vlog2.pop %v1615
        %v1679 = vmul.f32 %v1678, 0.6931472
        %v1680 = vlog2.pop %v1617
        %v1681 = vmul.f32 %v1680, 0.6931472
        %v1682 = vlog2.pop %v1619
        %v1683 = vmul.f32 %v1682, 0.6931472
        %v1684 = vlog2.pop %v1621
        %v1685 = vmul.f32 %v1684, 0.6931472
        %v1686 = vlog2.pop %v1623
        %v1687 = vmul.f32 %v1686, 0.6931472
        %v1688 = vlog2.pop %v1625
        %v1689 = vmul.f32 %v1688, 0.6931472
        %v1690 = vlog2.pop %v1627
        %v1691 = vmul.f32 %v1690, 0.6931472
        %v1692 = vlog2.pop %v1629
        %v1693 = vmul.f32 %v1692, 0.6931472
        %v1694 = vlog2.pop %v1631
        %v1695 = vmul.f32 %v1694, 0.6931472
        %v1696 = vlog2.pop %v1633
        %v1697 = vmul.f32 %v1696, 0.6931472
        %v1698 = vlog2.pop %v1635
        %v1699 = vmul.f32 %v1698, 0.6931472
        %v1700 = vlog2.pop %v1637
        %v1701 = vmul.f32 %v1700, 0.6931472
        %v1702 = vlog2.pop %v1639
        %v1703 = vmul.f32 %v1702, 0.6931472
        %v1704 = vlog2.pop %v1641
        %v1705 = vmul.f32 %v1704, 0.6931472
        %v1706 = vlog2.pop %v1643
        %v1707 = vmul.f32 %v1706, 0.6931472
        %v1708 = vlog2.pop %v1645
        %v1709 = vmul.f32 %v1708, 0.6931472
        %v1710 = vlog2.pop %v1647
        %v1711 = vmul.f32 %v1710, 0.6931472
        %v1712 = vlog2.pop %v1649
        %v1713 = vmul.f32 %v1712, 0.6931472
        %v1714 = vlog2.pop %v1651
        %v1715 = vmul.f32 %v1714, 0.6931472
        %v1716 = vlog2.pop %v1653
        %v1717 = vmul.f32 %v1716, 0.6931472
        %v1718 = vlog2.pop %v1655
        %v1719 = vmul.f32 %v1718, 0.6931472
        %v1720 = vlog2.pop %v1657
        %v1721 = vmul.f32 %v1720, 0.6931472
        %v1722 = vlog2.pop %v1659
        %v1723 = vmul.f32 %v1722, 0.6931472
        %v1724 = vlog2.pop %v1661
        %v1725 = vmul.f32 %v1724, 0.6931472
        %v1726 = vlog2.pop %v1663
        %v1727 = vmul.f32 %v1726, 0.6931472
        %v1728 = vlog2.pop %v1665
        %v1729 = vmul.f32 %v1728, 0.6931472
        %v1730 = vlog2.pop %v1667
        %v1731 = vmul.f32 %v1730, 0.6931472
        %v1732 = vlog2.pop %v1669
        %v1733 = vmul.f32 %v1732, 0.6931472
        %v1734 = vsub.f32 %v1510, %v1671
        %v1735 = vsub.f32 %v1511, %v1673
        %v1736 = vsub.f32 %v1512, %v1675
        %v1737 = vsub.f32 %v1513, %v1677
        %v1738 = vsub.f32 %v1514, %v1679
        %v1739 = vsub.f32 %v1515, %v1681
        %v1740 = vsub.f32 %v1516, %v1683
        %v1741 = vsub.f32 %v1517, %v1685
        %v1742 = vsub.f32 %v1518, %v1687
        %v1743 = vsub.f32 %v1519, %v1689
        %v1744 = vsub.f32 %v1520, %v1691
        %v1745 = vsub.f32 %v1521, %v1693
        %v1746 = vsub.f32 %v1522, %v1695
        %v1747 = vsub.f32 %v1523, %v1697
        %v1748 = vsub.f32 %v1524, %v1699
        %v1749 = vsub.f32 %v1525, %v1701
        %v1750 = vsub.f32 %v1526, %v1703
        %v1751 = vsub.f32 %v1527, %v1705
        %v1752 = vsub.f32 %v1528, %v1707
        %v1753 = vsub.f32 %v1529, %v1709
        %v1754 = vsub.f32 %v1530, %v1711
        %v1755 = vsub.f32 %v1531, %v1713
        %v1756 = vsub.f32 %v1532, %v1715
        %v1757 = vsub.f32 %v1533, %v1717
        %v1758 = vsub.f32 %v1534, %v1719
        %v1759 = vsub.f32 %v1535, %v1721
        %v1760 = vsub.f32 %v1536, %v1723
        %v1761 = vsub.f32 %v1537, %v1725
        %v1762 = vsub.f32 %v1538, %v1727
        %v1763 = vsub.f32 %v1539, %v1729
        %v1764 = vsub.f32 %v1540, %v1731
        %v1765 = vsub.f32 %v1541, %v1733
        %1766 = vst [vmem:[%s218] sm:$0xff] %v1734
        %1767 = vst [vmem:[%s218 + $0x8] sm:$0xff] %v1735
        %1768 = vst [vmem:[%s218 + $0x10] sm:$0xff] %v1736
        %1769 = vst [vmem:[%s218 + $0x18] sm:$0xff] %v1737
        %1770 = vst [vmem:[%s218 + $0x20] sm:$0xff] %v1738
        %1771 = vst [vmem:[%s218 + $0x28] sm:$0xff] %v1739
        %1772 = vst [vmem:[%s218 + $0x30] sm:$0xff] %v1740
        %1773 = vst [vmem:[%s218 + $0x38] sm:$0xff] %v1741
        %1774 = vst [vmem:[%s218 + $0x40] sm:$0xff] %v1742
        %1775 = vst [vmem:[%s218 + $0x48] sm:$0xff] %v1743
        %1776 = vst [vmem:[%s218 + $0x50] sm:$0xff] %v1744
        %1777 = vst [vmem:[%s218 + $0x58] sm:$0xff] %v1745
        %1778 = vst [vmem:[%s218 + $0x60] sm:$0xff] %v1746
        %1779 = vst [vmem:[%s218 + $0x68] sm:$0xff] %v1747
        %1780 = vst [vmem:[%s218 + $0x70] sm:$0xff] %v1748
        %1781 = vst [vmem:[%s218 + $0x78] sm:$0xff] %v1749
        %1782 = vst [vmem:[%s218 + $0x80] sm:$0xff] %v1750
        %1783 = vst [vmem:[%s218 + $0x88] sm:$0xff] %v1751
        %1784 = vst [vmem:[%s218 + $0x90] sm:$0xff] %v1752
        %1785 = vst [vmem:[%s218 + $0x98] sm:$0xff] %v1753
        %1786 = vst [vmem:[%s218 + $0xa0] sm:$0xff] %v1754
        %1787 = vst [vmem:[%s218 + $0xa8] sm:$0xff] %v1755
        %1788 = vst [vmem:[%s218 + $0xb0] sm:$0xff] %v1756
        %1789 = vst [vmem:[%s218 + $0xb8] sm:$0xff] %v1757
        %1790 = vst [vmem:[%s218 + $0xc0] sm:$0xff] %v1758
        %1791 = vst [vmem:[%s218 + $0xc8] sm:$0xff] %v1759
        %1792 = vst [vmem:[%s218 + $0xd0] sm:$0xff] %v1760
        %1793 = vst [vmem:[%s218 + $0xd8] sm:$0xff] %v1761
        %1794 = vst [vmem:[%s218 + $0xe0] sm:$0xff] %v1762
        %1795 = vst [vmem:[%s218 + $0xe8] sm:$0xff] %v1763
        %1796 = vst [vmem:[%s218 + $0xf0] sm:$0xff] %v1764
        %1797 = vst [vmem:[%s218 + $0xf8] sm:$0xff] %v1765
        %s1798 = sand.u32 %s137, 1
        %s1799 = scalar_lea.sflag [#allocation3], %s1798
        %s1800 = sand.u32 %s137, 1
        %s1801 = smul.addr %s1800, 256
        %s1802 = scalar_lea.vmem [#allocation2], %s1801
        // Predicated region
        $region41: #{ngram_forward_batch.1} parent=39 // pred_check
          %p1803 = pneg %p147
        $region42: #{ngram_forward_batch.1} parent=39 // pred_check_branch
          %1805 = sbr.rel (%p1803) target = $region44
        $region43: #{ngram_forward_batch.1} parent=39 // pred_region
          %s1806 = smul.u32 32, %s19
          %s1808 = ssub.s32 4096, 4096
          %1809 = vsyncadd %s1799, %s1808
          %s1810 = smul.addr %s1806, 128
          %s1811 = scalar_lea.hbm %s5, %s1810
          %s1812 = sshll.u32 %s1802, 4
          %s1813 = int_to_ptr.vmem [resolvable:$true] %s1812
          %1818 = dma.vmem_to_hbm [thread:$0]  %s1813, 4096, %s1811, %s1799, 128, 128, 8
        $region44: #{ngram_forward_batch.1} parent=39 // pred_fallthru
          _
      $region40: #{ngram_forward_batch.1} parent=5 // pred_fallthru
        _
      %p1819 = scmp.le.s32.totalorder 2, %s14
      // Predicated region
      $region45: #{ngram_forward_batch.1} parent=5 // pred_check
        %p1820 = pneg %p1819
      $region46: #{ngram_forward_batch.1} parent=5 // pred_check_branch
        %1822 = sbr.rel (%p1820) target = $region48
      $region47: #{ngram_forward_batch.1} parent=5 // pred_region
        %s1823 = ssub.s32 %s14, 2
        // Predicated region
        $region49: #{ngram_forward_batch.1} parent=47 // pred_check
          %p1824 = pneg %p153
        $region50: #{ngram_forward_batch.1} parent=47 // pred_check_branch
          %1826 = sbr.rel (%p1824) target = $region52
        $region51: #{ngram_forward_batch.1} parent=47 // pred_region
          %s1827 = sand.u32 %s138, 1
          %s1828 = scalar_lea.sflag [#allocation3], %s1827
          %s1829 = sand.u32 %s138, 1
          %s1830 = smul.addr %s1829, 256
          %s1831 = scalar_lea.vmem [#allocation2], %s1830
          %1832 = dma.done %s1828, 4096
        $region52: #{ngram_forward_batch.1} parent=47 // pred_fallthru
          _
      $region48: #{ngram_forward_batch.1} parent=5 // pred_fallthru
        _
    $region6: #{ngram_forward_batch.1} parent=1 // loop_footer
      %s18 = sadd.s32 1, %s14
    $region7: #{ngram_forward_batch.1} parent=1 // loop_footer_branch
      %13 = sbr.rel target = $region3
    $region8: #{ngram_forward_batch.1} parent=1 // loop_exit
      _
    %1833 = vsyncpa [#allocation3], 1
    %s1834 = scalar_lea.sflag [#allocation3], 1
    %1835 = vsyncpa %s1834, 1

</llo_original>
